<compile_context>
chip_gen: v7x
topology: tpu7x:2x2x1
jax: 0.10.0
libtpu: 0.0.40
codegen_flags: <defaults>
</compile_context>

<pallas_src>
from functools import partial

import numpy as np
import jax
import jax.numpy as jnp
from jax.experimental import pallas as pl
from jax.experimental.pallas import tpu as pltpu


def _round_up(x, m):
    return ((x + m - 1) // m) * m


def _device_kind():
    try:
        return jax.devices()[0].device_kind.lower()
    except Exception:
        return ""


def _is_v5e():
    kind = _device_kind()
    return ("v5 lite" in kind) or ("v5e" in kind) or ("v5litepod" in kind)


def _vmem_capacity_bytes():
    try:
        info = pltpu.get_tpu_info()
        cap = getattr(info, "vmem_capacity_bytes", None)
        if cap:
            return int(cap)
    except Exception:
        pass
    return 64 << 20  # conservative default = v7x per-TensorCore VMEM


# ---------------------------------------------------------------------------
# Pallas kernel: Top_Down_Baseline.forward hot path for one row tile.
#   b_ref   : (TN, Hp)  bf16  -- baseline_vatt rows for this tile
#   q_ref   : (TN, Hp)  bf16  -- qctx_vatt rows for this tile
#   Wv_ref  : (Hp, Hp)  bf16  -- v_net Linear (weight_norm folded) + ReLU
#   bv_ref  : (1, Hp)   f32
#   w1t_ref : (Hp, 128) bf16  -- proj1 weight in column 0, rest zero
#   scal_ref: (3,) f32 SMEM   -- (b1, w2, b2) = proj1 bias, proj2 weight/bias
#   Wc_ref  : (Hp, Lp)  bf16  -- classifier Linear
#   bc_ref  : (1, Lp)   f32
#   out_ref : (TN, Lp)  f32   -- logits for this row tile
# ---------------------------------------------------------------------------
def _top_down_kernel(b_ref, q_ref, Wv_ref, bv_ref, w1t_ref, scal_ref, Wc_ref,
                     bc_ref, out_ref, *, mix_in_bf16):
    TN = out_ref.shape[0]

    # Stack baseline+qctx rows (tile-aligned: TN is a multiple of 16) so the
    # v_net Linear runs as a single MXU matmul per tile (one Wv weight push).
    x = jnp.concatenate([b_ref[...], q_ref[...]], axis=0)        # (2*TN, Hp) bf16
    rep = jnp.maximum(
        jnp.dot(x, Wv_ref[...], preferred_element_type=jnp.float32)
        + bv_ref[...], 0.0)                                      # (2*TN, Hp) f32
    rep_bf = rep.astype(jnp.bfloat16)

    # proj1 via MXU (column 0 of w1t holds the real weight vector).
    p1 = jnp.dot(rep_bf, w1t_ref[...],
                 preferred_element_type=jnp.float32)[:, 0:1]     # (2*TN, 1)

    b1 = scal_ref[0]
    w2 = scal_ref[1]
    b2 = scal_ref[2]
    # sigmoid(proj2(max(0, proj1(rep))))
    conf = jax.nn.sigmoid(jnp.maximum(p1 + b1, 0.0) * w2 + b2)   # (2*TN, 1)

    conf_b = conf[:TN]
    conf_q = conf[TN:]
    inv = pl.reciprocal(conf_b + conf_q, approx=True)            # EUP
    wb = conf_b * inv
    wq = conf_q * inv

    if mix_in_bf16:
        # v6e/v7x: mix directly on the bf16 rep already materialized for
        # proj1 -> drops the f32 rep from the live set, halves VPU bytes.
        mixed_bf = (wb.astype(jnp.bfloat16) * rep_bf[:TN]
                    + wq.astype(jnp.bfloat16) * rep_bf[TN:])
    else:
        # v5e: no bf16 VALU -> keep the mix in f32, cast once at the end.
        mixed_bf = (wb * rep[:TN] + wq * rep[TN:]).astype(jnp.bfloat16)

    out_ref[...] = (
        jnp.dot(mixed_bf, Wc_ref[...], preferred_element_type=jnp.float32)
        + bc_ref[...])


def top_down_forward_pallas(b_vatt, q_vatt, Wv, bv, w1, scal3, Wc, bc):
    """logits (N, L) for N = B * max_role_count rows of hidden features."""
    N, H = b_vatt.shape
    L = Wc.shape[1]

    is_v5e = _is_v5e()
    pad_m = 128 if is_v5e else 256          # MXU-sized padding (128^2 vs 256^2)
    Hp = _round_up(H, pad_m)
    Lp = _round_up(L, pad_m)

    # Row tile: multiple of 16 (bf16 sublane tile), at least 2 tiles whenever
    # N > 16 so v7x's two TensorCores both get work; cap 256 on v6e/v7x.
    cap = 128 if is_v5e else 256
    TN = int(min(cap, _round_up(max(pl.cdiv(N, 2), 16), 16)))
    num_tiles = int(pl.cdiv(N, TN))
    N_pad = num_tiles * TN

    def pad2(a, r, c):
        a = jnp.asarray(a, jnp.float32)
        return jnp.pad(a, ((0, r - a.shape[0]), (0, c - a.shape[1])))

    # Activations passed separately (no host-side concat round trip), bf16.
    b_p = pad2(b_vatt, N_pad, Hp).astype(jnp.bfloat16)
    q_p = pad2(q_vatt, N_pad, Hp).astype(jnp.bfloat16)

    Wv_p = pad2(Wv, Hp, Hp).astype(jnp.bfloat16)
    bv_p = pad2(bv, 1, Hp)
    w1t = jnp.zeros((Hp, 128), jnp.float32).at[:H, 0].set(
        jnp.asarray(w1, jnp.float32)[0]).astype(jnp.bfloat16)
    Wc_p = pad2(Wc, Hp, Lp).astype(jnp.bfloat16)
    bc_p = pad2(bc, 1, Lp)
    scal = jnp.asarray(scal3, jnp.float32)

    vmem_cap = _vmem_capacity_bytes()
    cost = pl.CostEstimate(
        flops=(2 * (2 * N_pad) * Hp * Hp          # v_net
               + 2 * (2 * N_pad) * Hp * 128       # proj1
               + 2 * N_pad * Hp * Lp),            # classifier
        transcendentals=3 * N_pad,                # sigmoid + reciprocal
        bytes_accessed=int(2 * N_pad * Hp * 2
                           + (Hp * Hp + Hp * 128 + Hp * Lp) * 2
                           + (Hp + Lp) * 4 + N_pad * Lp * 4),
    )

    def run(use_buffered):
        wkw = {"pipeline_mode": pl.Buffered(1)} if use_buffered else {}
        in_specs = [
            pl.BlockSpec((TN, Hp), lambda t: (t, 0)),               # baseline tile
            pl.BlockSpec((TN, Hp), lambda t: (t, 0)),               # qctx tile
            pl.BlockSpec((Hp, Hp), lambda t: (0, 0), **wkw),        # Wv (resident)
            pl.BlockSpec((1, Hp), lambda t: (0, 0), **wkw),         # bv
            pl.BlockSpec((Hp, 128), lambda t: (0, 0), **wkw),       # w1t
            pl.BlockSpec(memory_space=pltpu.MemorySpace.SMEM),      # scal3
            pl.BlockSpec((Hp, Lp), lambda t: (0, 0), **wkw),        # Wc (resident)
            pl.BlockSpec((1, Lp), lambda t: (0, 0), **wkw),         # bc
        ]
        out_specs = pl.BlockSpec((TN, Lp), lambda t: (t, 0))

        weight_buf = 1 if use_buffered else 2
        weight_bytes = ((Hp * Hp + Hp * 128 + Hp * Lp) * 2
                        + (Hp + Lp) * 4) * weight_buf
        io_bytes = 2 * (2 * TN * Hp * 2) + 2 * (TN * Lp * 4)  # dbl-buffered tiles
        need = weight_bytes + io_bytes
        vmem_limit = int(min(max(vmem_cap - (8 << 20), 32 << 20),
                             max(32 << 20, 2 * need + (4 << 20))))

        grid_spec = pltpu.PrefetchScalarGridSpec(
            num_scalar_prefetch=0,
            grid=(num_tiles,),
            in_specs=in_specs,
            out_specs=out_specs,
        )
        out = pl.pallas_call(
            partial(_top_down_kernel, mix_in_bf16=not is_v5e),
            out_shape=jax.ShapeDtypeStruct((N_pad, Lp), jnp.float32),
            grid_spec=grid_spec,
            compiler_params=pltpu.CompilerParams(
                dimension_semantics=("parallel",),
                vmem_limit_bytes=vmem_limit),
            cost_estimate=cost,
        )(b_p, q_p, Wv_p, bv_p, w1t, scal, Wc_p, bc_p)
        return jax.block_until_ready(out)

    try:
        out = run(True)            # single-buffered resident weights
    except Exception:
        out = run(False)           # fallback: default double-buffering

    return out[:N, :L]


# ---------------------------------------------------------------------------
# Glue: synthetic stand-in for {baseline,qctx}_model.forward_hiddenrep.
# Produces a (B*R, H) hidden representation from the NCHW image + verb id.
# ---------------------------------------------------------------------------
def forward_hiddenrep_stub(params, v_org, gt_verb, max_role_count):
    B = v_org.shape[0]
    feat = jnp.mean(v_org, axis=(2, 3))                     # (B, C)  ~ convnet+avgpool
    img_emb = feat @ params["Wimg"] + params["bimg"]        # (B, H)
    verb_emb = params["verb_emb"][gt_verb]                  # (B, H)
    role_emb = params["role_emb"]                           # (R, H)
    h = jnp.tanh(img_emb[:, None, :] * verb_emb[:, None, :] + role_emb[None, :, :])
    return h.reshape(B * max_role_count, -1)                # (B*R, H)


def init_params(key, C, H, L, R, num_verbs):
    ks = jax.random.split(key, 12)
    s = 0.1
    params = {
        "base": {
            "Wimg": s * jax.random.normal(ks[0], (C, H), jnp.float32),
            "bimg": s * jax.random.normal(ks[1], (H,), jnp.float32),
            "verb_emb": s * jax.random.normal(ks[2], (num_verbs, H), jnp.float32),
            "role_emb": s * jax.random.normal(ks[3], (R, H), jnp.float32),
        },
        "qctx": {
            "Wimg": s * jax.random.normal(ks[4], (C, H), jnp.float32),
            "bimg": s * jax.random.normal(ks[5], (H,), jnp.float32),
            "verb_emb": s * jax.random.normal(ks[6], (num_verbs, H), jnp.float32),
            "role_emb": s * jax.random.normal(ks[7], (R, H), jnp.float32),
        },
        # v_net (weight_norm Linear H->H folded, + ReLU)
        "Wv": s * jax.random.normal(ks[8], (H, H), jnp.float32),
        "bv": s * jax.random.normal(ks[9], (1, H), jnp.float32),
        # proj1 (H->1) and proj2 (1->1): (b1, w2, b2)
        "w1": s * jax.random.normal(ks[10], (1, H), jnp.float32),
        "scal3": jnp.array([0.05, 1.3, -0.2], jnp.float32),
        # classifier (Linear H->L)
        "Wc": s * jax.random.normal(ks[11], (H, L), jnp.float32),
        "bc": jnp.zeros((1, L), jnp.float32),
    }
    return params


def reference_forward(params, b_vatt, q_vatt):
    """Pure-JAX reference of the in-kernel math (bf16 matmul operands,
    f32 accumulation / elementwise — mirrors the kernel's numerics)."""
    f32, bf = jnp.float32, jnp.bfloat16
    Wv = params["Wv"].astype(bf)
    bv = params["bv"]
    b_rep = jnp.maximum(
        jnp.dot(b_vatt.astype(bf), Wv, preferred_element_type=f32) + bv, 0.0)
    q_rep = jnp.maximum(
        jnp.dot(q_vatt.astype(bf), Wv, preferred_element_type=f32) + bv, 0.0)
    w1 = params["w1"].astype(bf)
    b1, w2, b2 = params["scal3"]
    p1_b = jnp.dot(b_rep.astype(bf), w1.T, preferred_element_type=f32) + b1
    p1_q = jnp.dot(q_rep.astype(bf), w1.T, preferred_element_type=f32) + b1
    conf_b = jax.nn.sigmoid(jnp.maximum(p1_b, 0.0) * w2 + b2)
    conf_q = jax.nn.sigmoid(jnp.maximum(p1_q, 0.0) * w2 + b2)
    cb = conf_b / (conf_b + conf_q)
    cq = conf_q / (conf_b + conf_q)
    out = cb * b_rep + cq * q_rep
    return (jnp.dot(out.astype(bf), params["Wc"].astype(bf),
                    preferred_element_type=f32) + params["bc"])


def top_down_baseline_forward(params, v_org, gt_verb, max_role_count):
    B = v_org.shape[0]
    b_vatt = forward_hiddenrep_stub(params["base"], v_org, gt_verb, max_role_count)
    q_vatt = forward_hiddenrep_stub(params["qctx"], v_org, gt_verb, max_role_count)
    logits = top_down_forward_pallas(
        b_vatt, q_vatt, params["Wv"], params["bv"], params["w1"],
        params["scal3"], params["Wc"], params["bc"])
    # role_label_pred = logits.view(B, max_role_count, -1)
    return logits.reshape(B, max_role_count, -1), b_vatt, q_vatt


if __name__ == "__main__":
    B, C, S = 4, 4, 16          # batch, image channels, spatial size
    H = 32                      # hidden dim
    L = 48                      # number of role labels (classifier out dim)
    R = 6                       # encoder.max_role_count
    NUM_VERBS = 10

    key = jax.random.PRNGKey(0)
    k_img, k_verb, k_par = jax.random.split(key, 3)

    v_org = jax.random.normal(k_img, (B, C, S, S), jnp.float32)   # NCHW
    gt_verb = jax.random.randint(k_verb, (B,), 0, NUM_VERBS, jnp.int32)
    params = init_params(k_par, C, H, L, R, NUM_VERBS)

    role_label_pred, b_vatt, q_vatt = top_down_baseline_forward(
        params, v_org, gt_verb, R)
    role_label_pred = jax.block_until_ready(role_label_pred)

    # sanity check against a pure-JAX reference with matching bf16 numerics
    ref = reference_forward(params, b_vatt, q_vatt).reshape(B, R, -1)
    assert role_label_pred.shape == (B, R, L)
    np.testing.assert_allclose(np.asarray(role_label_pred), np.asarray(ref),
                               rtol=2e-2, atol=2e-2)

    print("KERNEL_OK")
</pallas_src>

<mosaic_0001>
module attributes {stable_mosaic.version = 11 : i64} {
  func.func @_top_down_kernel(%arg0: i32, %arg1: memref<16x256xbf16, #tpu.memory_space<vmem>>, %arg2: memref<16x256xbf16, #tpu.memory_space<vmem>>, %arg3: memref<256x256xbf16, #tpu.memory_space<vmem>>, %arg4: memref<1x256xf32, #tpu.memory_space<vmem>>, %arg5: memref<256x128xbf16, #tpu.memory_space<vmem>>, %arg6: memref<3xf32, #tpu.memory_space<smem>>, %arg7: memref<256x256xbf16, #tpu.memory_space<vmem>>, %arg8: memref<1x256xf32, #tpu.memory_space<vmem>>, %arg9: memref<16x256xf32, #tpu.memory_space<vmem>>) attributes {dimension_semantics = [#tpu.dimension_semantics<parallel>], iteration_bounds = array<i64: 2>, scalar_prefetch = 0 : i64, scratch_operands = 0 : i64, tpu.core_type = #tpu.core_type<tc>, window_params = [{transform_indices = @transform_0, window_bounds = array<i64: 16, 256>}, {transform_indices = @transform_1, window_bounds = array<i64: 16, 256>}, {pipeline_mode = #tpu.pipeline_mode<synchronous>, transform_indices = @transform_2, window_bounds = array<i64: 256, 256>}, {pipeline_mode = #tpu.pipeline_mode<synchronous>, transform_indices = @transform_3, window_bounds = array<i64: 1, 256>}, {pipeline_mode = #tpu.pipeline_mode<synchronous>, transform_indices = @transform_4, window_bounds = array<i64: 256, 128>}, {transform_indices = @transform_5, window_bounds = array<i64: 3>}, {pipeline_mode = #tpu.pipeline_mode<synchronous>, transform_indices = @transform_6, window_bounds = array<i64: 256, 256>}, {pipeline_mode = #tpu.pipeline_mode<synchronous>, transform_indices = @transform_7, window_bounds = array<i64: 1, 256>}, {transform_indices = @transform_8, window_bounds = array<i64: 16, 256>}]} {
    %c0 = arith.constant 0 : index
    %c0_0 = arith.constant 0 : index
    %0 = vector.load %arg1[%c0, %c0_0] : memref<16x256xbf16, #tpu.memory_space<vmem>>, vector<16x256xbf16>
    %c0_1 = arith.constant 0 : index
    %c0_2 = arith.constant 0 : index
    %1 = vector.load %arg2[%c0_1, %c0_2] : memref<16x256xbf16, #tpu.memory_space<vmem>>, vector<16x256xbf16>
    %2 = tpu.concatenate %0, %1 in 0 : vector<16x256xbf16>, vector<16x256xbf16> -> vector<32x256xbf16>
    %c0_3 = arith.constant 0 : index
    %c0_4 = arith.constant 0 : index
    %3 = vector.load %arg3[%c0_3, %c0_4] : memref<256x256xbf16, #tpu.memory_space<vmem>>, vector<256x256xbf16>
    %cst = arith.constant dense<0.000000e+00> : vector<32x256xf32>
    %4 = tpu.matmul %2, %3, %cst {dimension_numbers = #tpu.dot_dimension_numbers<[1], [0], [0], [1], [0, 0, 1, 1], [], []>} : vector<32x256xbf16>, vector<256x256xbf16>, vector<32x256xf32> -> vector<32x256xf32>
    %c0_5 = arith.constant 0 : index
    %c0_6 = arith.constant 0 : index
    %5 = vector.load %arg4[%c0_5, %c0_6] : memref<1x256xf32, #tpu.memory_space<vmem>>, vector<1x256xf32>
    %6 = vector.broadcast %5 : vector<1x256xf32> to vector<32x256xf32>
    %7 = arith.addf %4, %6 : vector<32x256xf32>
    %cst_7 = arith.constant 0.000000e+00 : f32
    %8 = vector.broadcast %cst_7 : f32 to vector<32x256xf32>
    %9 = arith.maximumf %7, %8 : vector<32x256xf32>
    %10 = arith.truncf %9 : vector<32x256xf32> to vector<32x256xbf16>
    %c0_8 = arith.constant 0 : index
    %c0_9 = arith.constant 0 : index
    %11 = vector.load %arg5[%c0_8, %c0_9] : memref<256x128xbf16, #tpu.memory_space<vmem>>, vector<256x128xbf16>
    %cst_10 = arith.constant dense<0.000000e+00> : vector<32x128xf32>
    %12 = tpu.matmul %10, %11, %cst_10 {dimension_numbers = #tpu.dot_dimension_numbers<[1], [0], [0], [1], [0, 0, 1, 1], [], []>} : vector<32x256xbf16>, vector<256x128xbf16>, vector<32x128xf32> -> vector<32x128xf32>
    %13 = vector.extract_strided_slice %12 {offsets = [0, 0], sizes = [32, 1], strides = [1, 1]} : vector<32x128xf32> to vector<32x1xf32>
    %c0_11 = arith.constant 0 : index
    %14 = memref.load %arg6[%c0_11] : memref<3xf32, #tpu.memory_space<smem>>
    %c1 = arith.constant 1 : index
    %15 = memref.load %arg6[%c1] : memref<3xf32, #tpu.memory_space<smem>>
    %c2 = arith.constant 2 : index
    %16 = memref.load %arg6[%c2] : memref<3xf32, #tpu.memory_space<smem>>
    %17 = vector.broadcast %14 : f32 to vector<32x1xf32>
    %18 = arith.addf %13, %17 : vector<32x1xf32>
    %cst_12 = arith.constant 0.000000e+00 : f32
    %19 = vector.broadcast %cst_12 : f32 to vector<32x1xf32>
    %20 = arith.maximumf %18, %19 : vector<32x1xf32>
    %21 = vector.broadcast %15 : f32 to vector<32x1xf32>
    %22 = arith.mulf %20, %21 : vector<32x1xf32>
    %23 = vector.broadcast %16 : f32 to vector<32x1xf32>
    %24 = arith.addf %22, %23 : vector<32x1xf32>
    %25 = arith.negf %24 : vector<32x1xf32>
    %26 = math.exp %25 : vector<32x1xf32>
    %cst_13 = arith.constant 1.000000e+00 : f32
    %27 = vector.broadcast %cst_13 : f32 to vector<32x1xf32>
    %28 = arith.addf %27, %26 : vector<32x1xf32>
    %29 = arith.divf %27, %28 : vector<32x1xf32>
    %30 = vector.extract_strided_slice %29 {offsets = [0, 0], sizes = [16, 1], strides = [1, 1]} : vector<32x1xf32> to vector<16x1xf32>
    %31 = vector.extract_strided_slice %29 {offsets = [16, 0], sizes = [16, 1], strides = [1, 1]} : vector<32x1xf32> to vector<16x1xf32>
    %32 = arith.addf %30, %31 : vector<16x1xf32>
    %33 = tpu.reciprocal %32 {approx = true} : vector<16x1xf32> -> vector<16x1xf32>
    %34 = arith.mulf %30, %33 : vector<16x1xf32>
    %35 = arith.mulf %31, %33 : vector<16x1xf32>
    %36 = arith.truncf %34 : vector<16x1xf32> to vector<16x1xbf16>
    %37 = vector.extract_strided_slice %10 {offsets = [0, 0], sizes = [16, 256], strides = [1, 1]} : vector<32x256xbf16> to vector<16x256xbf16>
    %38 = vector.broadcast %36 : vector<16x1xbf16> to vector<16x256xbf16>
    %39 = arith.mulf %38, %37 : vector<16x256xbf16>
    %40 = arith.truncf %35 : vector<16x1xf32> to vector<16x1xbf16>
    %41 = vector.extract_strided_slice %10 {offsets = [16, 0], sizes = [16, 256], strides = [1, 1]} : vector<32x256xbf16> to vector<16x256xbf16>
    %42 = vector.broadcast %40 : vector<16x1xbf16> to vector<16x256xbf16>
    %43 = arith.mulf %42, %41 : vector<16x256xbf16>
    %44 = arith.addf %39, %43 : vector<16x256xbf16>
    %c0_14 = arith.constant 0 : index
    %c0_15 = arith.constant 0 : index
    %45 = vector.load %arg7[%c0_14, %c0_15] : memref<256x256xbf16, #tpu.memory_space<vmem>>, vector<256x256xbf16>
    %cst_16 = arith.constant dense<0.000000e+00> : vector<16x256xf32>
    %46 = tpu.matmul %44, %45, %cst_16 {dimension_numbers = #tpu.dot_dimension_numbers<[1], [0], [0], [1], [0, 0, 1, 1], [], []>} : vector<16x256xbf16>, vector<256x256xbf16>, vector<16x256xf32> -> vector<16x256xf32>
    %c0_17 = arith.constant 0 : index
    %c0_18 = arith.constant 0 : index
    %47 = vector.load %arg8[%c0_17, %c0_18] : memref<1x256xf32, #tpu.memory_space<vmem>>, vector<1x256xf32>
    %48 = vector.broadcast %47 : vector<1x256xf32> to vector<16x256xf32>
    %49 = arith.addf %46, %48 : vector<16x256xf32>
    %c0_19 = arith.constant 0 : index
    %c0_20 = arith.constant 0 : index
    %50 = vector.load %arg9[%c0_19, %c0_20] : memref<16x256xf32, #tpu.memory_space<vmem>>, vector<16x256xf32>
    tpu.vector_store %arg9[%c0_19, %c0_20], %49 {strides = array<i32>} : memref<16x256xf32, #tpu.memory_space<vmem>>, vector<16x256xf32>,
    return
  }
  func.func @transform_0(%arg0: i32) -> (i32, i32) {
    %c0_i32 = arith.constant 0 : i32
    %c0_i32_0 = arith.constant 0 : i32
    return %arg0, %c0_i32 : i32, i32
  }
  func.func @transform_1(%arg0: i32) -> (i32, i32) {
    %c0_i32 = arith.constant 0 : i32
    %c0_i32_0 = arith.constant 0 : i32
    return %arg0, %c0_i32 : i32, i32
  }
  func.func @transform_2(%arg0: i32) -> (i32, i32) {
    %c0_i32 = arith.constant 0 : i32
    %c0_i32_0 = arith.constant 0 : i32
    %c0_i32_1 = arith.constant 0 : i32
    return %c0_i32, %c0_i32_0 : i32, i32
  }
  func.func @transform_3(%arg0: i32) -> (i32, i32) {
    %c0_i32 = arith.constant 0 : i32
    %c0_i32_0 = arith.constant 0 : i32
    %c0_i32_1 = arith.constant 0 : i32
    return %c0_i32, %c0_i32_0 : i32, i32
  }
  func.func @transform_4(%arg0: i32) -> (i32, i32) {
    %c0_i32 = arith.constant 0 : i32
    %c0_i32_0 = arith.constant 0 : i32
    %c0_i32_1 = arith.constant 0 : i32
    return %c0_i32, %c0_i32_0 : i32, i32
  }
  func.func @transform_5(%arg0: i32) -> i32 {
    %c0_i32 = arith.constant 0 : i32
    %c0_i32_0 = arith.constant 0 : i32
    return %c0_i32 : i32
  }
  func.func @transform_6(%arg0: i32) -> (i32, i32) {
    %c0_i32 = arith.constant 0 : i32
    %c0_i32_0 = arith.constant 0 : i32
    %c0_i32_1 = arith.constant 0 : i32
    return %c0_i32, %c0_i32_0 : i32, i32
  }
  func.func @transform_7(%arg0: i32) -> (i32, i32) {
    %c0_i32 = arith.constant 0 : i32
    %c0_i32_0 = arith.constant 0 : i32
    %c0_i32_1 = arith.constant 0 : i32
    return %c0_i32, %c0_i32_0 : i32, i32
  }
  func.func @transform_8(%arg0: i32) -> (i32, i32) {
    %c0_i32 = arith.constant 0 : i32
    %c0_i32_0 = arith.constant 0 : i32
    return %arg0, %c0_i32 : i32, i32
  }
}

module attributes {stable_mosaic.version = 11 : i64} {
  func.func @_top_down_kernel(%arg0: i32, %arg1: memref<16x256xbf16, #tpu.memory_space<vmem>>, %arg2: memref<16x256xbf16, #tpu.memory_space<vmem>>, %arg3: memref<256x256xbf16, #tpu.memory_space<vmem>>, %arg4: memref<1x256xf32, #tpu.memory_space<vmem>>, %arg5: memref<256x128xbf16, #tpu.memory_space<vmem>>, %arg6: memref<3xf32, #tpu.memory_space<smem>>, %arg7: memref<256x256xbf16, #tpu.memory_space<vmem>>, %arg8: memref<1x256xf32, #tpu.memory_space<vmem>>, %arg9: memref<16x256xf32, #tpu.memory_space<vmem>>) attributes {dimension_semantics = [#tpu.dimension_semantics<parallel>], iteration_bounds = array<i64: 2>, scalar_prefetch = 0 : i64, scratch_operands = 0 : i64, tpu.core_type = #tpu.core_type<tc>, window_params = [{transform_indices = @transform_0, window_bounds = array<i64: 16, 256>}, {transform_indices = @transform_1, window_bounds = array<i64: 16, 256>}, {pipeline_mode = #tpu.pipeline_mode<synchronous>, transform_indices = @transform_2, window_bounds = array<i64: 256, 256>}, {pipeline_mode = #tpu.pipeline_mode<synchronous>, transform_indices = @transform_3, window_bounds = array<i64: 1, 256>}, {pipeline_mode = #tpu.pipeline_mode<synchronous>, transform_indices = @transform_4, window_bounds = array<i64: 256, 128>}, {transform_indices = @transform_5, window_bounds = array<i64: 3>}, {pipeline_mode = #tpu.pipeline_mode<synchronous>, transform_indices = @transform_6, window_bounds = array<i64: 256, 256>}, {pipeline_mode = #tpu.pipeline_mode<synchronous>, transform_indices = @transform_7, window_bounds = array<i64: 1, 256>}, {transform_indices = @transform_8, window_bounds = array<i64: 16, 256>}]} {
    %c0 = arith.constant 0 : index
    %c0_0 = arith.constant 0 : index
    %0 = vector.load %arg1[%c0, %c0_0] : memref<16x256xbf16, #tpu.memory_space<vmem>>, vector<16x256xbf16>
    %c0_1 = arith.constant 0 : index
    %c0_2 = arith.constant 0 : index
    %1 = vector.load %arg2[%c0_1, %c0_2] : memref<16x256xbf16, #tpu.memory_space<vmem>>, vector<16x256xbf16>
    %2 = tpu.concatenate %0, %1 in 0 : vector<16x256xbf16>, vector<16x256xbf16> -> vector<32x256xbf16>
    %c0_3 = arith.constant 0 : index
    %c0_4 = arith.constant 0 : index
    %3 = vector.load %arg3[%c0_3, %c0_4] : memref<256x256xbf16, #tpu.memory_space<vmem>>, vector<256x256xbf16>
    %cst = arith.constant dense<0.000000e+00> : vector<32x256xf32>
    %4 = tpu.matmul %2, %3, %cst {dimension_numbers = #tpu.dot_dimension_numbers<[1], [0], [0], [1], [0, 0, 1, 1], [], []>} : vector<32x256xbf16>, vector<256x256xbf16>, vector<32x256xf32> -> vector<32x256xf32>
    %c0_5 = arith.constant 0 : index
    %c0_6 = arith.constant 0 : index
    %5 = vector.load %arg4[%c0_5, %c0_6] : memref<1x256xf32, #tpu.memory_space<vmem>>, vector<1x256xf32>
    %6 = vector.broadcast %5 : vector<1x256xf32> to vector<32x256xf32>
    %7 = arith.addf %4, %6 : vector<32x256xf32>
    %cst_7 = arith.constant 0.000000e+00 : f32
    %8 = vector.broadcast %cst_7 : f32 to vector<32x256xf32>
    %9 = arith.maximumf %7, %8 : vector<32x256xf32>
    %10 = arith.truncf %9 : vector<32x256xf32> to vector<32x256xbf16>
    %c0_8 = arith.constant 0 : index
    %c0_9 = arith.constant 0 : index
    %11 = vector.load %arg5[%c0_8, %c0_9] : memref<256x128xbf16, #tpu.memory_space<vmem>>, vector<256x128xbf16>
    %cst_10 = arith.constant dense<0.000000e+00> : vector<32x128xf32>
    %12 = tpu.matmul %10, %11, %cst_10 {dimension_numbers = #tpu.dot_dimension_numbers<[1], [0], [0], [1], [0, 0, 1, 1], [], []>} : vector<32x256xbf16>, vector<256x128xbf16>, vector<32x128xf32> -> vector<32x128xf32>
    %13 = vector.extract_strided_slice %12 {offsets = [0, 0], sizes = [32, 1], strides = [1, 1]} : vector<32x128xf32> to vector<32x1xf32>
    %c0_11 = arith.constant 0 : index
    %14 = memref.load %arg6[%c0_11] : memref<3xf32, #tpu.memory_space<smem>>
    %c1 = arith.constant 1 : index
    %15 = memref.load %arg6[%c1] : memref<3xf32, #tpu.memory_space<smem>>
    %c2 = arith.constant 2 : index
    %16 = memref.load %arg6[%c2] : memref<3xf32, #tpu.memory_space<smem>>
    %17 = vector.broadcast %14 : f32 to vector<32x1xf32>
    %18 = arith.addf %13, %17 : vector<32x1xf32>
    %cst_12 = arith.constant 0.000000e+00 : f32
    %19 = vector.broadcast %cst_12 : f32 to vector<32x1xf32>
    %20 = arith.maximumf %18, %19 : vector<32x1xf32>
    %21 = vector.broadcast %15 : f32 to vector<32x1xf32>
    %22 = arith.mulf %20, %21 : vector<32x1xf32>
    %23 = vector.broadcast %16 : f32 to vector<32x1xf32>
    %24 = arith.addf %22, %23 : vector<32x1xf32>
    %25 = arith.negf %24 : vector<32x1xf32>
    %26 = math.exp %25 : vector<32x1xf32>
    %cst_13 = arith.constant 1.000000e+00 : f32
    %27 = vector.broadcast %cst_13 : f32 to vector<32x1xf32>
    %28 = arith.addf %27, %26 : vector<32x1xf32>
    %29 = arith.divf %27, %28 : vector<32x1xf32>
    %30 = vector.extract_strided_slice %29 {offsets = [0, 0], sizes = [16, 1], strides = [1, 1]} : vector<32x1xf32> to vector<16x1xf32>
    %31 = vector.extract_strided_slice %29 {offsets = [16, 0], sizes = [16, 1], strides = [1, 1]} : vector<32x1xf32> to vector<16x1xf32>
    %32 = arith.addf %30, %31 : vector<16x1xf32>
    %33 = tpu.reciprocal %32 {approx = true} : vector<16x1xf32> -> vector<16x1xf32>
    %34 = arith.mulf %30, %33 : vector<16x1xf32>
    %35 = arith.mulf %31, %33 : vector<16x1xf32>
    %36 = arith.truncf %34 : vector<16x1xf32> to vector<16x1xbf16>
    %37 = vector.extract_strided_slice %10 {offsets = [0, 0], sizes = [16, 256], strides = [1, 1]} : vector<32x256xbf16> to vector<16x256xbf16>
    %38 = vector.broadcast %36 : vector<16x1xbf16> to vector<16x256xbf16>
    %39 = arith.mulf %38, %37 : vector<16x256xbf16>
    %40 = arith.truncf %35 : vector<16x1xf32> to vector<16x1xbf16>
    %41 = vector.extract_strided_slice %10 {offsets = [16, 0], sizes = [16, 256], strides = [1, 1]} : vector<32x256xbf16> to vector<16x256xbf16>
    %42 = vector.broadcast %40 : vector<16x1xbf16> to vector<16x256xbf16>
    %43 = arith.mulf %42, %41 : vector<16x256xbf16>
    %44 = arith.addf %39, %43 : vector<16x256xbf16>
    %c0_14 = arith.constant 0 : index
    %c0_15 = arith.constant 0 : index
    %45 = vector.load %arg7[%c0_14, %c0_15] : memref<256x256xbf16, #tpu.memory_space<vmem>>, vector<256x256xbf16>
    %cst_16 = arith.constant dense<0.000000e+00> : vector<16x256xf32>
    %46 = tpu.matmul %44, %45, %cst_16 {dimension_numbers = #tpu.dot_dimension_numbers<[1], [0], [0], [1], [0, 0, 1, 1], [], []>} : vector<16x256xbf16>, vector<256x256xbf16>, vector<16x256xf32> -> vector<16x256xf32>
    %c0_17 = arith.constant 0 : index
    %c0_18 = arith.constant 0 : index
    %47 = vector.load %arg8[%c0_17, %c0_18] : memref<1x256xf32, #tpu.memory_space<vmem>>, vector<1x256xf32>
    %48 = vector.broadcast %47 : vector<1x256xf32> to vector<16x256xf32>
    %49 = arith.addf %46, %48 : vector<16x256xf32>
    %c0_19 = arith.constant 0 : index
    %c0_20 = arith.constant 0 : index
    %50 = vector.load %arg9[%c0_19, %c0_20] : memref<16x256xf32, #tpu.memory_space<vmem>>, vector<16x256xf32>
    tpu.vector_store %arg9[%c0_19, %c0_20], %49 {strides = array<i32>} : memref<16x256xf32, #tpu.memory_space<vmem>>, vector<16x256xf32>,
    return
  }
  func.func @transform_0(%arg0: i32) -> (i32, i32) {
    %c0_i32 = arith.constant 0 : i32
    %c0_i32_0 = arith.constant 0 : i32
    return %arg0, %c0_i32 : i32, i32
  }
  func.func @transform_1(%arg0: i32) -> (i32, i32) {
    %c0_i32 = arith.constant 0 : i32
    %c0_i32_0 = arith.constant 0 : i32
    return %arg0, %c0_i32 : i32, i32
  }
  func.func @transform_2(%arg0: i32) -> (i32, i32) {
    %c0_i32 = arith.constant 0 : i32
    %c0_i32_0 = arith.constant 0 : i32
    %c0_i32_1 = arith.constant 0 : i32
    return %c0_i32, %c0_i32_0 : i32, i32
  }
  func.func @transform_3(%arg0: i32) -> (i32, i32) {
    %c0_i32 = arith.constant 0 : i32
    %c0_i32_0 = arith.constant 0 : i32
    %c0_i32_1 = arith.constant 0 : i32
    return %c0_i32, %c0_i32_0 : i32, i32
  }
  func.func @transform_4(%arg0: i32) -> (i32, i32) {
    %c0_i32 = arith.constant 0 : i32
    %c0_i32_0 = arith.constant 0 : i32
    %c0_i32_1 = arith.constant 0 : i32
    return %c0_i32, %c0_i32_0 : i32, i32
  }
  func.func @transform_5(%arg0: i32) -> i32 {
    %c0_i32 = arith.constant 0 : i32
    %c0_i32_0 = arith.constant 0 : i32
    return %c0_i32 : i32
  }
  func.func @transform_6(%arg0: i32) -> (i32, i32) {
    %c0_i32 = arith.constant 0 : i32
    %c0_i32_0 = arith.constant 0 : i32
    %c0_i32_1 = arith.constant 0 : i32
    return %c0_i32, %c0_i32_0 : i32, i32
  }
  func.func @transform_7(%arg0: i32) -> (i32, i32) {
    %c0_i32 = arith.constant 0 : i32
    %c0_i32_0 = arith.constant 0 : i32
    %c0_i32_1 = arith.constant 0 : i32
    return %c0_i32, %c0_i32_0 : i32, i32
  }
  func.func @transform_8(%arg0: i32) -> (i32, i32) {
    %c0_i32 = arith.constant 0 : i32
    %c0_i32_0 = arith.constant 0 : i32
    return %arg0, %c0_i32 : i32, i32
  }
}

</mosaic_0001>

<llo_original>
// kernel: tpu_custom_call.1
$region0: #{tpu_custom_call.1}
  #allocation0 [shape = 'u32[]', space=smem, size = 0x4, offset = 0x4, fixed_abs, tag = 'smem constant byte address 0x4 - core index']
  #allocation1 [shape = 'u32[144,128]{1,0:T(1,128)}', space=vmem, size = 0x12000, scoped, tag = 'internal scratch']
  %s0 = inlined_call_operand.hbm [shape: bf16[32,256], index: 0, kind: input, shape index: {}]
  %s1 = inlined_call_operand.hbm [shape: bf16[32,256], index: 1, kind: input, shape index: {}]
  %s2 = inlined_call_operand.hbm [shape: bf16[256,256], index: 2, kind: input, shape index: {}]
  %s3 = inlined_call_operand.vmem [shape: f32[1,256], index: 3, kind: input, shape index: {}]
  %s4 = inlined_call_operand.hbm [shape: bf16[256,128], index: 4, kind: input, shape index: {}]
  %s5 = inlined_call_operand.vmem [shape: f32[3], index: 5, kind: input, shape index: {}]
  %s6 = inlined_call_operand.hbm [shape: bf16[256,256], index: 6, kind: input, shape index: {}]
  %s7 = inlined_call_operand.vmem [shape: f32[1,256], index: 7, kind: input, shape index: {}]
  %s8 = inlined_call_operand.hbm [shape: f32[32,256], index: 8, kind: output, shape index: {}]
  %s9 = sld [smem:[#allocation0]]
  $region89: #{tpu_custom_call.1} parent=0
    _
  %s11 = ssub.s32 1, %s9
  %s12 = scalar_select 0, %s11, %s9
  $region1: #{tpu_custom_call.1} parent=0
    #allocation2 [shape = 'u8[16384]{0}', space=vmem, size = 0x4000, scoped, tag = 'input window, operand 0']
    #allocation3 [shape = 's32[2]{0}', space=sflag, size = 0x8, scoped, tag = 'scoped memory for tpu_custom_call.1']
    #allocation4 [shape = 's32[2]{0}', space=sflag, size = 0x8, scoped, tag = 'scoped memory for tpu_custom_call.1']
    #allocation5 [shape = 's32[2]{0}', space=sflag, size = 0x8, scoped, tag = 'scoped memory for tpu_custom_call.1']
    #allocation6 [shape = 'u8[16384]{0}', space=vmem, size = 0x4000, scoped, tag = 'input window, operand 1']
    #allocation7 [shape = 's32[2]{0}', space=sflag, size = 0x8, scoped, tag = 'scoped memory for tpu_custom_call.1']
    #allocation8 [shape = 'u8[131072]{0}', space=vmem, size = 0x20000, scoped, tag = 'input window, operand 2, single buffered']
    #allocation9 [shape = 'u8[65536]{0}', space=vmem, size = 0x10000, scoped, tag = 'input window, operand 4, single buffered']
    #allocation10 [shape = 's32[1]{0}', space=sflag, size = 0x4, scoped, tag = 'scoped memory for tpu_custom_call.1']
    #allocation11 [shape = 'u8[512]{0}', space=smem, size = 0x200, scoped, tag = 'input window, operand 5, single buffered']
    #allocation12 [shape = 'u8[131072]{0}', space=vmem, size = 0x20000, scoped, tag = 'input window, operand 6, single buffered']
    #allocation13 [shape = 'u8[32768]{0}', space=vmem, size = 0x8000, scoped, tag = 'output window, operand 0']
    %13 = vsyncpa [#allocation3], 0
    %s14 = scalar_lea.sflag [#allocation3], 1
    %15 = vsyncpa %s14, 0
    %16 = vsyncpa [#allocation7], 0
    %s17 = scalar_lea.sflag [#allocation7], 1
    %18 = vsyncpa %s17, 0
    %19 = vsyncpa [#allocation10], 0
    %20 = vsyncpa [#allocation5], 0
    %21 = vsyncpa [#allocation4], 0
    %s22 = scalar_lea.sflag [#allocation4], 1
    %23 = vsyncpa %s22, 0
    loop: start=0, step=1, limit=4
    $region2: #{tpu_custom_call.1} parent=1 // loop_pre_header
      _
    $region3: #{tpu_custom_call.1} parent=1 // loop_header
      %s25 = sphi 0, %s29
      %p26 = scmp.ge.s32.totalorder %s25, 4
      %s35 = sphi 0, %s37
      %s38 = sphi 0, %s35
      %s39 = sphi 0, %s38
      %s55 = sphi 0, %s39
      %s61 = sphi 0, %s63
      %s64 = sphi 0, %s61
      %s65 = sphi 0, %s64
      %s81 = sphi 0, %s65
      %s85 = sphi 0, %s85
      %s87 = sphi 0, %s85
      %s88 = sphi 0, %s87
      %s102 = sphi 0, %s88
      %s106 = sphi 0, %s106
      %s108 = sphi 0, %s106
      %s109 = sphi 0, %s108
      %s123 = sphi 0, %s109
      %s127 = sphi 0, %s127
      %s129 = sphi 0, %s127
      %s130 = sphi 0, %s129
      %s144 = sphi 0, %s130
      %s148 = sphi 0, %s148
      %s150 = sphi 0, %s148
      %s151 = sphi 0, %s150
      %s165 = sphi 0, %s151
      %s169 = sphi 0, %s169
      %s171 = sphi 0, %s169
      %s172 = sphi 0, %s171
      %s186 = sphi 0, %s172
      %s190 = sphi 0, %s190
      %s192 = sphi 0, %s190
      %s193 = sphi 0, %s192
      %s207 = sphi 0, %s193
      %s213 = sphi 0, %s215
      %s216 = sphi 0, %s213
      %s217 = sphi 0, %s216
      %s233 = sphi 0, %s217
    $region4: #{tpu_custom_call.1} parent=1 // loop_header_branch
      %28 = sbr.rel (%p26) target = $region8
    $region5: #{tpu_custom_call.1} parent=1 // loop_body
      %s30 = ssub.s32 %s25, 1
      %s31 = ssub.s32 %s25, 2
      %s32 = sadd.s32 %s25, 1
      %s33 = ssub.s32 %s25, %s32
      %p34 = scmp.eq.s32.totalorder %s33, 0
      %s36 = sadd.s32 %s35, 1
      %s37 = scalar_select %p34, %s35, %s36
      %p40 = pneg %p34
      %p41 = scmp.eq.s32.totalorder %s25, 1
      %p42 = por %p40, %p41
      %p43 = scmp.ne.s32.totalorder %s35, %s38
      %p44 = scmp.eq.s32.totalorder %s25, 0
      %p45 = por %p43, %p44
      %p46 = scmp.ne.s32.totalorder %s35, %s38
      %p47 = scmp.eq.s32.totalorder %s30, 1
      %p48 = por %p46, %p47
      %p49 = scmp.ne.s32.totalorder %s38, %s39
      %p50 = scmp.eq.s32.totalorder %s30, 0
      %p51 = por %p49, %p50
      %p52 = scmp.ne.s32.totalorder %s38, %s39
      %p53 = scmp.eq.s32.totalorder %s31, 1
      %p54 = por %p52, %p53
      %p56 = scmp.ne.s32.totalorder %s39, %s55
      %p57 = scmp.eq.s32.totalorder %s31, 0
      %p58 = por %p56, %p57
      %s59 = ssub.s32 %s25, %s32
      %p60 = scmp.eq.s32.totalorder %s59, 0
      %s62 = sadd.s32 %s61, 1
      %s63 = scalar_select %p60, %s61, %s62
      %p66 = pneg %p60
      %p67 = scmp.eq.s32.totalorder %s25, 1
      %p68 = por %p66, %p67
      %p69 = scmp.ne.s32.totalorder %s61, %s64
      %p70 = scmp.eq.s32.totalorder %s25, 0
      %p71 = por %p69, %p70
      %p72 = scmp.ne.s32.totalorder %s61, %s64
      %p73 = scmp.eq.s32.totalorder %s30, 1
      %p74 = por %p72, %p73
      %p75 = scmp.ne.s32.totalorder %s64, %s65
      %p76 = scmp.eq.s32.totalorder %s30, 0
      %p77 = por %p75, %p76
      %p78 = scmp.ne.s32.totalorder %s64, %s65
      %p79 = scmp.eq.s32.totalorder %s31, 1
      %p80 = por %p78, %p79
      %p82 = scmp.ne.s32.totalorder %s65, %s81
      %p83 = scmp.eq.s32.totalorder %s31, 0
      %p84 = por %p82, %p83
      %s86 = sadd.s32 %s85, 1
      %p89 = scmp.eq.s32.totalorder %s25, 1
      %p90 = scmp.ne.s32.totalorder %s85, %s87
      %p91 = scmp.eq.s32.totalorder %s25, 0
      %p92 = por %p90, %p91
      %p93 = scmp.ne.s32.totalorder %s85, %s87
      %p94 = scmp.eq.s32.totalorder %s30, 1
      %p95 = por %p93, %p94
      %p96 = scmp.ne.s32.totalorder %s87, %s88
      %p97 = scmp.eq.s32.totalorder %s30, 0
      %p98 = por %p96, %p97
      %p99 = scmp.ne.s32.totalorder %s87, %s88
      %p100 = scmp.eq.s32.totalorder %s31, 1
      %p101 = por %p99, %p100
      %p103 = scmp.ne.s32.totalorder %s88, %s102
      %p104 = scmp.eq.s32.totalorder %s31, 0
      %p105 = por %p103, %p104
      %s107 = sadd.s32 %s106, 1
      %p110 = scmp.eq.s32.totalorder %s25, 1
      %p111 = scmp.ne.s32.totalorder %s106, %s108
      %p112 = scmp.eq.s32.totalorder %s25, 0
      %p113 = por %p111, %p112
      %p114 = scmp.ne.s32.totalorder %s106, %s108
      %p115 = scmp.eq.s32.totalorder %s30, 1
      %p116 = por %p114, %p115
      %p117 = scmp.ne.s32.totalorder %s108, %s109
      %p118 = scmp.eq.s32.totalorder %s30, 0
      %p119 = por %p117, %p118
      %p120 = scmp.ne.s32.totalorder %s108, %s109
      %p121 = scmp.eq.s32.totalorder %s31, 1
      %p122 = por %p120, %p121
      %p124 = scmp.ne.s32.totalorder %s109, %s123
      %p125 = scmp.eq.s32.totalorder %s31, 0
      %p126 = por %p124, %p125
      %s128 = sadd.s32 %s127, 1
      %p131 = scmp.eq.s32.totalorder %s25, 1
      %p132 = scmp.ne.s32.totalorder %s127, %s129
      %p133 = scmp.eq.s32.totalorder %s25, 0
      %p134 = por %p132, %p133
      %p135 = scmp.ne.s32.totalorder %s127, %s129
      %p136 = scmp.eq.s32.totalorder %s30, 1
      %p137 = por %p135, %p136
      %p138 = scmp.ne.s32.totalorder %s129, %s130
      %p139 = scmp.eq.s32.totalorder %s30, 0
      %p140 = por %p138, %p139
      %p141 = scmp.ne.s32.totalorder %s129, %s130
      %p142 = scmp.eq.s32.totalorder %s31, 1
      %p143 = por %p141, %p142
      %p145 = scmp.ne.s32.totalorder %s130, %s144
      %p146 = scmp.eq.s32.totalorder %s31, 0
      %p147 = por %p145, %p146
      %s149 = sadd.s32 %s148, 1
      %p152 = scmp.eq.s32.totalorder %s25, 1
      %p153 = scmp.ne.s32.totalorder %s148, %s150
      %p154 = scmp.eq.s32.totalorder %s25, 0
      %p155 = por %p153, %p154
      %p156 = scmp.ne.s32.totalorder %s148, %s150
      %p157 = scmp.eq.s32.totalorder %s30, 1
      %p158 = por %p156, %p157
      %p159 = scmp.ne.s32.totalorder %s150, %s151
      %p160 = scmp.eq.s32.totalorder %s30, 0
      %p161 = por %p159, %p160
      %p162 = scmp.ne.s32.totalorder %s150, %s151
      %p163 = scmp.eq.s32.totalorder %s31, 1
      %p164 = por %p162, %p163
      %p166 = scmp.ne.s32.totalorder %s151, %s165
      %p167 = scmp.eq.s32.totalorder %s31, 0
      %p168 = por %p166, %p167
      %s170 = sadd.s32 %s169, 1
      %p173 = scmp.eq.s32.totalorder %s25, 1
      %p174 = scmp.ne.s32.totalorder %s169, %s171
      %p175 = scmp.eq.s32.totalorder %s25, 0
      %p176 = por %p174, %p175
      %p177 = scmp.ne.s32.totalorder %s169, %s171
      %p178 = scmp.eq.s32.totalorder %s30, 1
      %p179 = por %p177, %p178
      %p180 = scmp.ne.s32.totalorder %s171, %s172
      %p181 = scmp.eq.s32.totalorder %s30, 0
      %p182 = por %p180, %p181
      %p183 = scmp.ne.s32.totalorder %s171, %s172
      %p184 = scmp.eq.s32.totalorder %s31, 1
      %p185 = por %p183, %p184
      %p187 = scmp.ne.s32.totalorder %s172, %s186
      %p188 = scmp.eq.s32.totalorder %s31, 0
      %p189 = por %p187, %p188
      %s191 = sadd.s32 %s190, 1
      %p194 = scmp.eq.s32.totalorder %s25, 1
      %p195 = scmp.ne.s32.totalorder %s190, %s192
      %p196 = scmp.eq.s32.totalorder %s25, 0
      %p197 = por %p195, %p196
      %p198 = scmp.ne.s32.totalorder %s190, %s192
      %p199 = scmp.eq.s32.totalorder %s30, 1
      %p200 = por %p198, %p199
      %p201 = scmp.ne.s32.totalorder %s192, %s193
      %p202 = scmp.eq.s32.totalorder %s30, 0
      %p203 = por %p201, %p202
      %p204 = scmp.ne.s32.totalorder %s192, %s193
      %p205 = scmp.eq.s32.totalorder %s31, 1
      %p206 = por %p204, %p205
      %p208 = scmp.ne.s32.totalorder %s193, %s207
      %p209 = scmp.eq.s32.totalorder %s31, 0
      %p210 = por %p208, %p209
      %s211 = ssub.s32 %s25, %s32
      %p212 = scmp.eq.s32.totalorder %s211, 0
      %s214 = sadd.s32 %s213, 1
      %s215 = scalar_select %p212, %s213, %s214
      %p218 = pneg %p212
      %p219 = scmp.eq.s32.totalorder %s25, 1
      %p220 = por %p218, %p219
      %p221 = scmp.ne.s32.totalorder %s213, %s216
      %p222 = scmp.eq.s32.totalorder %s25, 0
      %p223 = por %p221, %p222
      %p224 = scmp.ne.s32.totalorder %s213, %s216
      %p225 = scmp.eq.s32.totalorder %s30, 1
      %p226 = por %p224, %p225
      %p227 = scmp.ne.s32.totalorder %s216, %s217
      %p228 = scmp.eq.s32.totalorder %s30, 0
      %p229 = por %p227, %p228
      %p230 = scmp.ne.s32.totalorder %s216, %s217
      %p231 = scmp.eq.s32.totalorder %s31, 1
      %p232 = por %p230, %p231
      %p234 = scmp.ne.s32.totalorder %s217, %s233
      %p235 = scmp.eq.s32.totalorder %s31, 0
      %p236 = por %p234, %p235
      %p237 = scmp.le.s32.totalorder 1, %s25
      %p238 = scmp.lt.s32.totalorder %s25, 3
      %p239 = pnand %p237, %p238
      %p240 = pneg %p239
      // Predicated region
      $region9: #{tpu_custom_call.1} parent=5 // pred_check
        _
      $region10: #{tpu_custom_call.1} parent=5 // pred_check_branch
        %242 = sbr.rel (%p239) target = $region12
      $region11: #{tpu_custom_call.1} parent=5 // pred_region
        %s243 = ssub.s32 %s25, 1
        // Predicated region
        $region13: #{tpu_custom_call.1} parent=11 // pred_check
          %p244 = pneg %p98
        $region14: #{tpu_custom_call.1} parent=11 // pred_check_branch
          %246 = sbr.rel (%p244) target = $region16
        $region15: #{tpu_custom_call.1} parent=11 // pred_region
          %s248 = ssub.s32 4096, 4096
          %249 = vsyncadd [#allocation7], %s248
          %s250 = sshll.u32 [#allocation8], 4
          %s251 = int_to_ptr.vmem [resolvable:$true] %s250
          %256 = dma.hbm_to_vmem [thread:$0]  %s2, 4096, %s251, [#allocation7], 128, 128, 8
        $region16: #{tpu_custom_call.1} parent=11 // pred_fallthru
          _
        // Predicated region
        $region17: #{tpu_custom_call.1} parent=11 // pred_check
          %p257 = pneg %p119
        $region18: #{tpu_custom_call.1} parent=11 // pred_check_branch
          %259 = sbr.rel (%p257) target = $region20
        $region19: #{tpu_custom_call.1} parent=11 // pred_region
          _
        $region20: #{tpu_custom_call.1} parent=11 // pred_fallthru
          _
        // Predicated region
        $region21: #{tpu_custom_call.1} parent=11 // pred_check
          %p260 = pneg %p140
        $region22: #{tpu_custom_call.1} parent=11 // pred_check_branch
          %262 = sbr.rel (%p260) target = $region24
        $region23: #{tpu_custom_call.1} parent=11 // pred_region
          %s264 = ssub.s32 2048, 2048
          %265 = vsyncadd [#allocation10], %s264
          %s266 = sshll.u32 [#allocation9], 4
          %s267 = int_to_ptr.vmem [resolvable:$true] %s266
          %272 = dma.hbm_to_vmem [thread:$0]  %s4, 2048, %s267, [#allocation10], 64, 64, 4
        $region24: #{tpu_custom_call.1} parent=11 // pred_fallthru
          _
        // Predicated region
        $region25: #{tpu_custom_call.1} parent=11 // pred_check
          %p273 = pneg %p161
        $region26: #{tpu_custom_call.1} parent=11 // pred_check_branch
          %275 = sbr.rel (%p273) target = $region28
        $region27: #{tpu_custom_call.1} parent=11 // pred_region
          %s277 = ssub.s32 16, 16
          %278 = vsyncadd [#allocation5], %s277
          %s280 = sshll.u32 %s5, 4
          %s281 = int_to_ptr.vmem [resolvable:$true] %s280
          %283 = dma.vmem_to_smem %s281, 16, [#allocation11], [#allocation5]
        $region28: #{tpu_custom_call.1} parent=11 // pred_fallthru
          _
        // Predicated region
        $region29: #{tpu_custom_call.1} parent=11 // pred_check
          %p284 = pneg %p182
        $region30: #{tpu_custom_call.1} parent=11 // pred_check_branch
          %286 = sbr.rel (%p284) target = $region32
        $region31: #{tpu_custom_call.1} parent=11 // pred_region
          %s288 = ssub.s32 4096, 4096
          %289 = vsyncadd [#allocation10], %s288
          %s290 = sshll.u32 [#allocation12], 4
          %s291 = int_to_ptr.vmem [resolvable:$true] %s290
          %296 = dma.hbm_to_vmem [thread:$0]  %s6, 4096, %s291, [#allocation10], 128, 128, 8
        $region32: #{tpu_custom_call.1} parent=11 // pred_fallthru
          _
        // Predicated region
        $region33: #{tpu_custom_call.1} parent=11 // pred_check
          %p297 = pneg %p203
        $region34: #{tpu_custom_call.1} parent=11 // pred_check_branch
          %299 = sbr.rel (%p297) target = $region36
        $region35: #{tpu_custom_call.1} parent=11 // pred_region
          _
        $region36: #{tpu_custom_call.1} parent=11 // pred_fallthru
          _
      $region12: #{tpu_custom_call.1} parent=5 // pred_fallthru
        _
      %p300 = scmp.lt.s32.totalorder %s25, 2
      // Predicated region
      $region37: #{tpu_custom_call.1} parent=5 // pred_check
        %p301 = pneg %p300
      $region38: #{tpu_custom_call.1} parent=5 // pred_check_branch
        %303 = sbr.rel (%p301) target = $region40
      $region39: #{tpu_custom_call.1} parent=5 // pred_region
        // Predicated region
        $region41: #{tpu_custom_call.1} parent=39 // pred_check
          %p304 = pneg %p45
        $region42: #{tpu_custom_call.1} parent=39 // pred_check_branch
          %306 = sbr.rel (%p304) target = $region44
        $region43: #{tpu_custom_call.1} parent=39 // pred_region
          %s307 = sand.u32 %s35, 1
          %s308 = scalar_lea.sflag [#allocation3], %s307
          %s309 = sand.u32 %s35, 1
          %s310 = smul.addr %s309, 16
          %s311 = scalar_lea.vmem [#allocation2], %s310
          %s312 = smul.u32 2, %s25
          %s314 = ssub.s32 256, 256
          %315 = vsyncadd %s308, %s314
          %s316 = smul.addr %s312, 2
          %s317 = smul.addr %s316, 64
          %s318 = scalar_lea.hbm %s0, %s317
          %s319 = sshll.u32 %s311, 4
          %s320 = int_to_ptr.vmem [resolvable:$true] %s319
          %325 = dma.hbm_to_vmem [thread:$0]  %s318, 256, %s320, %s308, 128, 128, 8
        $region44: #{tpu_custom_call.1} parent=39 // pred_fallthru
          _
        // Predicated region
        $region45: #{tpu_custom_call.1} parent=39 // pred_check
          %p326 = pneg %p71
        $region46: #{tpu_custom_call.1} parent=39 // pred_check_branch
          %328 = sbr.rel (%p326) target = $region48
        $region47: #{tpu_custom_call.1} parent=39 // pred_region
          %s329 = sand.u32 %s25, 1
          %s330 = scalar_lea.sflag [#allocation7], %s329
          %s331 = sand.u32 %s61, 1
          %s332 = smul.addr %s331, 16
          %s333 = scalar_lea.vmem [#allocation6], %s332
          %s334 = smul.u32 2, %s25
          %s336 = ssub.s32 256, 256
          %337 = vsyncadd %s330, %s336
          %s338 = smul.addr %s334, 2
          %s339 = smul.addr %s338, 64
          %s340 = scalar_lea.hbm %s1, %s339
          %s341 = sshll.u32 %s333, 4
          %s342 = int_to_ptr.vmem [resolvable:$true] %s341
          %347 = dma.hbm_to_vmem [thread:$0]  %s340, 256, %s342, %s330, 128, 128, 8
        $region48: #{tpu_custom_call.1} parent=39 // pred_fallthru
          _
      $region40: #{tpu_custom_call.1} parent=5 // pred_fallthru
        _
      %p348 = scmp.le.s32.totalorder 1, %s25
      %p349 = scmp.lt.s32.totalorder %s25, 3
      %p350 = pnand %p348, %p349
      %p351 = pneg %p350
      // Predicated region
      $region49: #{tpu_custom_call.1} parent=5 // pred_check
        _
      $region50: #{tpu_custom_call.1} parent=5 // pred_check_branch
        %353 = sbr.rel (%p350) target = $region52
      $region51: #{tpu_custom_call.1} parent=5 // pred_region
        %s354 = ssub.s32 %s25, 1
        %s355 = sand.u32 %s38, 1
        %s356 = scalar_lea.sflag [#allocation3], %s355
        %s357 = sand.u32 %s38, 1
        %s358 = smul.addr %s357, 16
        %s359 = scalar_lea.vmem [#allocation2], %s358
        // Predicated region
        $region53: #{tpu_custom_call.1} parent=51 // pred_check
          %p360 = pneg %p51
        $region54: #{tpu_custom_call.1} parent=51 // pred_check_branch
          %362 = sbr.rel (%p360) target = $region56
        $region55: #{tpu_custom_call.1} parent=51 // pred_region
          %363 = dma.done %s356, 256
        $region56: #{tpu_custom_call.1} parent=51 // pred_fallthru
          _
        %s364 = sand.u32 %s30, 1
        %s365 = scalar_lea.sflag [#allocation7], %s364
        %s366 = sand.u32 %s64, 1
        %s367 = smul.addr %s366, 16
        %s368 = scalar_lea.vmem [#allocation6], %s367
        // Predicated region
        $region57: #{tpu_custom_call.1} parent=51 // pred_check
          %p369 = pneg %p77
        $region58: #{tpu_custom_call.1} parent=51 // pred_check_branch
          %371 = sbr.rel (%p369) target = $region60
        $region59: #{tpu_custom_call.1} parent=51 // pred_region
          %372 = dma.done %s365, 256
        $region60: #{tpu_custom_call.1} parent=51 // pred_fallthru
          _
        // Predicated region
        $region61: #{tpu_custom_call.1} parent=51 // pred_check
          %p373 = pneg %p98
        $region62: #{tpu_custom_call.1} parent=51 // pred_check_branch
          %375 = sbr.rel (%p373) target = $region64
        $region63: #{tpu_custom_call.1} parent=51 // pred_region
          %376 = dma.done [#allocation7], 4096
        $region64: #{tpu_custom_call.1} parent=51 // pred_fallthru
          _
        // Predicated region
        $region65: #{tpu_custom_call.1} parent=51 // pred_check
          %p377 = pneg %p140
        $region66: #{tpu_custom_call.1} parent=51 // pred_check_branch
          %379 = sbr.rel (%p377) target = $region68
        $region67: #{tpu_custom_call.1} parent=51 // pred_region
          %380 = dma.done [#allocation10], 2048
        $region68: #{tpu_custom_call.1} parent=51 // pred_fallthru
          _
        // Predicated region
        $region69: #{tpu_custom_call.1} parent=51 // pred_check
          %p381 = pneg %p161
        $region70: #{tpu_custom_call.1} parent=51 // pred_check_branch
          %383 = sbr.rel (%p381) target = $region72
        $region71: #{tpu_custom_call.1} parent=51 // pred_region
          %384 = dma.done [#allocation5], 16
        $region72: #{tpu_custom_call.1} parent=51 // pred_fallthru
          _
        // Predicated region
        $region73: #{tpu_custom_call.1} parent=51 // pred_check
          %p385 = pneg %p182
        $region74: #{tpu_custom_call.1} parent=51 // pred_check_branch
          %387 = sbr.rel (%p385) target = $region76
        $region75: #{tpu_custom_call.1} parent=51 // pred_region
          %388 = dma.done [#allocation10], 4096
        $region76: #{tpu_custom_call.1} parent=51 // pred_fallthru
          _
        %389 = sfence
        %s390 = sand.u32 %s38, 1
        %s391 = scalar_lea.sflag [#allocation3], %s390
        %s392 = sand.u32 %s38, 1
        %s393 = smul.addr %s392, 16
        %s394 = scalar_lea.vmem [#allocation2], %s393
        %p395 = pneg %p51
        %p396 = pneg %p48
        %s397 = sand.u32 %s30, 1
        %s398 = scalar_lea.sflag [#allocation7], %s397
        %s399 = sand.u32 %s64, 1
        %s400 = smul.addr %s399, 16
        %s401 = scalar_lea.vmem [#allocation6], %s400
        %p402 = pneg %p77
        %p403 = pneg %p74
        %p404 = pneg %p98
        %p405 = pneg %p95
        %p406 = pneg %p119
        %p407 = pneg %p116
        %p408 = pneg %p140
        %p409 = pneg %p137
        %p410 = pneg %p161
        %p411 = pneg %p158
        %p412 = pneg %p182
        %p413 = pneg %p179
        %p414 = pneg %p203
        %p415 = pneg %p200
        %p416 = pneg %p229
        %p417 = pneg %p226
        %s418 = sand.u32 %s216, 1
        %s419 = scalar_lea.sflag [#allocation4], %s418
        %s420 = sand.u32 %s216, 1
        %s421 = smul.addr %s420, 32
        %s422 = scalar_lea.vmem [#allocation13], %s421
        %s423 = smul.u32 2, %s30
        %s424 = smul.u32 2, %s30
        %s425 = smul.u32 2, %s30
        %v427 = vld [vmem:[%s359] sm:$0xff]
        %v428 = vld [vmem:[%s359 + $0x8] sm:$0xff]
        %v429 = vld [vmem:[%s368] sm:$0xff]
        %v430 = vld [vmem:[%s368 + $0x8] sm:$0xff]
        %v433 = vunpack.c.l.b16 %v427
        %v434 = vunpack.c.h.b16 %v427
        %v435 = vunpack.c.l.b16 %v428
        %v436 = vunpack.c.h.b16 %v428
        %v437 = vpack.c.b16 %v435, %v433
        %v438 = vpack.c.b16 %v436, %v434
        %v443 = vunpack.c.l.b16 %v429
        %v444 = vunpack.c.h.b16 %v429
        %v445 = vunpack.c.l.b16 %v430
        %v446 = vunpack.c.h.b16 %v430
        %v447 = vpack.c.b16 %v445, %v443
        %v448 = vpack.c.b16 %v446, %v444
        %v451 = vld [vmem:[#allocation8] sm:$0xff]
        %v452 = vld [vmem:[#allocation8 + $0x8] sm:$0xff]
        %v453 = vld [vmem:[#allocation8 + $0x10] sm:$0xff]
        %v454 = vld [vmem:[#allocation8 + $0x18] sm:$0xff]
        %v455 = vld [vmem:[#allocation8 + $0x20] sm:$0xff]
        %v456 = vld [vmem:[#allocation8 + $0x28] sm:$0xff]
        %v457 = vld [vmem:[#allocation8 + $0x30] sm:$0xff]
        %v458 = vld [vmem:[#allocation8 + $0x38] sm:$0xff]
        %v459 = vld [vmem:[#allocation8 + $0x40] sm:$0xff]
        %v460 = vld [vmem:[#allocation8 + $0x48] sm:$0xff]
        %v461 = vld [vmem:[#allocation8 + $0x50] sm:$0xff]
        %v462 = vld [vmem:[#allocation8 + $0x58] sm:$0xff]
        %v463 = vld [vmem:[#allocation8 + $0x60] sm:$0xff]
        %v464 = vld [vmem:[#allocation8 + $0x68] sm:$0xff]
        %v465 = vld [vmem:[#allocation8 + $0x70] sm:$0xff]
        %v466 = vld [vmem:[#allocation8 + $0x78] sm:$0xff]
        %v467 = vld [vmem:[#allocation8 + $0x80] sm:$0xff]
        %v468 = vld [vmem:[#allocation8 + $0x88] sm:$0xff]
        %v469 = vld [vmem:[#allocation8 + $0x90] sm:$0xff]
        %v470 = vld [vmem:[#allocation8 + $0x98] sm:$0xff]
        %v471 = vld [vmem:[#allocation8 + $0xa0] sm:$0xff]
        %v472 = vld [vmem:[#allocation8 + $0xa8] sm:$0xff]
        %v473 = vld [vmem:[#allocation8 + $0xb0] sm:$0xff]
        %v474 = vld [vmem:[#allocation8 + $0xb8] sm:$0xff]
        %v475 = vld [vmem:[#allocation8 + $0xc0] sm:$0xff]
        %v476 = vld [vmem:[#allocation8 + $0xc8] sm:$0xff]
        %v477 = vld [vmem:[#allocation8 + $0xd0] sm:$0xff]
        %v478 = vld [vmem:[#allocation8 + $0xd8] sm:$0xff]
        %v479 = vld [vmem:[#allocation8 + $0xe0] sm:$0xff]
        %v480 = vld [vmem:[#allocation8 + $0xe8] sm:$0xff]
        %v481 = vld [vmem:[#allocation8 + $0xf0] sm:$0xff]
        %v482 = vld [vmem:[#allocation8 + $0xf8] sm:$0xff]
        %v483 = vld [vmem:[%s3] sm:$0x3]
        %v485 = vlaneseq
        %v486 = vshrl.u32 %v485, 7
        %v487 = vsub.s32 0, %v486
        %v488 = vrot.slane %v483, %v487
        %v489 = vlaneseq
        %v490 = vshrl.u32 %v489, 7
        %v491 = vsub.s32 1, %v490
        %v492 = vrot.slane %v483, %v491
        %v527 = vunpack.c.l.b16 %v451
        %v528 = vunpack.c.h.b16 %v451
        %v529 = vunpack.c.l.b16 %v452
        %v530 = vunpack.c.h.b16 %v452
        %v531 = vunpack.c.l.b16 %v453
        %v532 = vunpack.c.h.b16 %v453
        %v533 = vunpack.c.l.b16 %v454
        %v534 = vunpack.c.h.b16 %v454
        %v535 = vunpack.c.l.b16 %v455
        %v536 = vunpack.c.h.b16 %v455
        %v537 = vunpack.c.l.b16 %v456
        %v538 = vunpack.c.h.b16 %v456
        %v539 = vunpack.c.l.b16 %v457
        %v540 = vunpack.c.h.b16 %v457
        %v541 = vunpack.c.l.b16 %v458
        %v542 = vunpack.c.h.b16 %v458
        %v543 = vunpack.c.l.b16 %v459
        %v544 = vunpack.c.h.b16 %v459
        %v545 = vunpack.c.l.b16 %v460
        %v546 = vunpack.c.h.b16 %v460
        %v547 = vunpack.c.l.b16 %v461
        %v548 = vunpack.c.h.b16 %v461
        %v549 = vunpack.c.l.b16 %v462
        %v550 = vunpack.c.h.b16 %v462
        %v551 = vunpack.c.l.b16 %v463
        %v552 = vunpack.c.h.b16 %v463
        %v553 = vunpack.c.l.b16 %v464
        %v554 = vunpack.c.h.b16 %v464
        %v555 = vunpack.c.l.b16 %v465
        %v556 = vunpack.c.h.b16 %v465
        %v557 = vunpack.c.l.b16 %v466
        %v558 = vunpack.c.h.b16 %v466
        %v559 = vunpack.c.l.b16 %v467
        %v560 = vunpack.c.h.b16 %v467
        %v561 = vunpack.c.l.b16 %v468
        %v562 = vunpack.c.h.b16 %v468
        %v563 = vunpack.c.l.b16 %v469
        %v564 = vunpack.c.h.b16 %v469
        %v565 = vunpack.c.l.b16 %v470
        %v566 = vunpack.c.h.b16 %v470
        %v567 = vunpack.c.l.b16 %v471
        %v568 = vunpack.c.h.b16 %v471
        %v569 = vunpack.c.l.b16 %v472
        %v570 = vunpack.c.h.b16 %v472
        %v571 = vunpack.c.l.b16 %v473
        %v572 = vunpack.c.h.b16 %v473
        %v573 = vunpack.c.l.b16 %v474
        %v574 = vunpack.c.h.b16 %v474
        %v575 = vunpack.c.l.b16 %v475
        %v576 = vunpack.c.h.b16 %v475
        %v577 = vunpack.c.l.b16 %v476
        %v578 = vunpack.c.h.b16 %v476
        %v579 = vunpack.c.l.b16 %v477
        %v580 = vunpack.c.h.b16 %v477
        %v581 = vunpack.c.l.b16 %v478
        %v582 = vunpack.c.h.b16 %v478
        %v583 = vunpack.c.l.b16 %v479
        %v584 = vunpack.c.h.b16 %v479
        %v585 = vunpack.c.l.b16 %v480
        %v586 = vunpack.c.h.b16 %v480
        %v587 = vunpack.c.l.b16 %v481
        %v588 = vunpack.c.h.b16 %v481
        %v589 = vunpack.c.l.b16 %v482
        %v590 = vunpack.c.h.b16 %v482
        %v591 = vpack.c.b16 %v529, %v527
        %v592 = vpack.c.b16 %v530, %v528
        %v593 = vpack.c.b16 %v533, %v531
        %v594 = vpack.c.b16 %v534, %v532
        %v595 = vpack.c.b16 %v537, %v535
        %v596 = vpack.c.b16 %v538, %v536
        %v597 = vpack.c.b16 %v541, %v539
        %v598 = vpack.c.b16 %v542, %v540
        %v599 = vpack.c.b16 %v545, %v543
        %v600 = vpack.c.b16 %v546, %v544
        %v601 = vpack.c.b16 %v549, %v547
        %v602 = vpack.c.b16 %v550, %v548
        %v603 = vpack.c.b16 %v553, %v551
        %v604 = vpack.c.b16 %v554, %v552
        %v605 = vpack.c.b16 %v557, %v555
        %v606 = vpack.c.b16 %v558, %v556
        %v607 = vpack.c.b16 %v561, %v559
        %v608 = vpack.c.b16 %v562, %v560
        %v609 = vpack.c.b16 %v565, %v563
        %v610 = vpack.c.b16 %v566, %v564
        %v611 = vpack.c.b16 %v569, %v567
        %v612 = vpack.c.b16 %v570, %v568
        %v613 = vpack.c.b16 %v573, %v571
        %v614 = vpack.c.b16 %v574, %v572
        %v615 = vpack.c.b16 %v577, %v575
        %v616 = vpack.c.b16 %v578, %v576
        %v617 = vpack.c.b16 %v581, %v579
        %v618 = vpack.c.b16 %v582, %v580
        %v619 = vpack.c.b16 %v585, %v583
        %v620 = vpack.c.b16 %v586, %v584
        %v621 = vpack.c.b16 %v589, %v587
        %v622 = vpack.c.b16 %v590, %v588
        %655 = vmatprep.subr.bf16.mxu0 %v592
        %656 = vmatpush1.bf16.msra.mxu0 %v591
        %657 = vmatprep.subr.bf16.mxu0 %v594
        %658 = vmatpush1.bf16.msra.mxu0 %v593
        %659 = vmatprep.subr.bf16.mxu0 %v596
        %660 = vmatpush1.bf16.msra.mxu0 %v595
        %661 = vmatprep.subr.bf16.mxu0 %v598
        %662 = vmatpush1.bf16.msra.mxu0 %v597
        %663 = vmatprep.subr.bf16.mxu0 %v600
        %664 = vmatpush1.bf16.msra.mxu0 %v599
        %665 = vmatprep.subr.bf16.mxu0 %v602
        %666 = vmatpush1.bf16.msra.mxu0 %v601
        %667 = vmatprep.subr.bf16.mxu0 %v604
        %668 = vmatpush1.bf16.msra.mxu0 %v603
        %669 = vmatprep.subr.bf16.mxu0 %v606
        %670 = vmatpush1.bf16.msra.mxu0 %v605
        %671 = vmatprep.subr.bf16.mxu0 %v608
        %672 = vmatpush1.bf16.msra.mxu0 %v607
        %673 = vmatprep.subr.bf16.mxu0 %v610
        %674 = vmatpush1.bf16.msra.mxu0 %v609
        %675 = vmatprep.subr.bf16.mxu0 %v612
        %676 = vmatpush1.bf16.msra.mxu0 %v611
        %677 = vmatprep.subr.bf16.mxu0 %v614
        %678 = vmatpush1.bf16.msra.mxu0 %v613
        %679 = vmatprep.subr.bf16.mxu0 %v616
        %680 = vmatpush1.bf16.msra.mxu0 %v615
        %681 = vmatprep.subr.bf16.mxu0 %v618
        %682 = vmatpush1.bf16.msra.mxu0 %v617
        %683 = vmatprep.subr.bf16.mxu0 %v620
        %684 = vmatpush1.bf16.msra.mxu0 %v619
        %685 = vmatprep.subr.bf16.mxu0 %v622
        %686 = vmatpush1.bf16.msra.mxu0 %v621
        %687 = vmatprep.mubr.bf16.mxu0 %v438
        %688 = vmatmul.mubr.bf16.gmra.mrb[0].mxu0 %v437
        %v689 = vpop.f32.mrb[0].mxu0
        %v690 = vadd.f32 %v488, %v689
        %v691 = vpop.f32.mrb[0].mxu0
        %v692 = vadd.f32 %v492, %v691
        %v693 = vpop.f32.mrb[0].mxu0
        %v694 = vadd.f32 %v488, %v693
        %v695 = vpop.f32.mrb[0].mxu0
        %v696 = vadd.f32 %v492, %v695
        %697 = vmatprep.mubr.bf16.mxu0 %v448
        %698 = vmatmul.mubr.bf16.gmra.mrb[0].mxu0 %v447
        %v699 = vpop.f32.mrb[0].mxu0
        %v700 = vadd.f32 %v488, %v699
        %v701 = vpop.f32.mrb[0].mxu0
        %v702 = vadd.f32 %v492, %v701
        %v703 = vpop.f32.mrb[0].mxu0
        %v704 = vadd.f32 %v488, %v703
        %v705 = vpop.f32.mrb[0].mxu0
        %v706 = vadd.f32 %v492, %v705
        %707 = vdwg.mxu0
        %v708 = vmax.f32 %v690, 0.0
        %v709 = vmax.f32 %v692, 0.0
        %v710 = vmax.f32 %v694, 0.0
        %v711 = vmax.f32 %v696, 0.0
        %v712 = vmax.f32 %v700, 0.0
        %v713 = vmax.f32 %v702, 0.0
        %v714 = vmax.f32 %v704, 0.0
        %v715 = vmax.f32 %v706, 0.0
        %v716 = vpack.c.bf16 %v710, %v708
        %v717 = vpack.c.bf16 %v711, %v709
        %v718 = vpack.c.bf16 %v714, %v712
        %v719 = vpack.c.bf16 %v715, %v713
        %v720 = vld [vmem:[#allocation9] sm:$0xf]
        %v721 = vld [vmem:[#allocation9 + $0x4] sm:$0xf]
        %v722 = vld [vmem:[#allocation9 + $0x8] sm:$0xf]
        %v723 = vld [vmem:[#allocation9 + $0xc] sm:$0xf]
        %v724 = vld [vmem:[#allocation9 + $0x10] sm:$0xf]
        %v725 = vld [vmem:[#allocation9 + $0x14] sm:$0xf]
        %v726 = vld [vmem:[#allocation9 + $0x18] sm:$0xf]
        %v727 = vld [vmem:[#allocation9 + $0x1c] sm:$0xf]
        %v728 = vld [vmem:[#allocation9 + $0x20] sm:$0xf]
        %v729 = vld [vmem:[#allocation9 + $0x24] sm:$0xf]
        %v730 = vld [vmem:[#allocation9 + $0x28] sm:$0xf]
        %v731 = vld [vmem:[#allocation9 + $0x2c] sm:$0xf]
        %v732 = vld [vmem:[#allocation9 + $0x30] sm:$0xf]
        %v733 = vld [vmem:[#allocation9 + $0x34] sm:$0xf]
        %v734 = vld [vmem:[#allocation9 + $0x38] sm:$0xf]
        %v735 = vld [vmem:[#allocation9 + $0x3c] sm:$0xf]
        %v736 = vld [vmem:[#allocation9 + $0x40] sm:$0xf]
        %v737 = vld [vmem:[#allocation9 + $0x44] sm:$0xf]
        %v738 = vld [vmem:[#allocation9 + $0x48] sm:$0xf]
        %v739 = vld [vmem:[#allocation9 + $0x4c] sm:$0xf]
        %v740 = vld [vmem:[#allocation9 + $0x50] sm:$0xf]
        %v741 = vld [vmem:[#allocation9 + $0x54] sm:$0xf]
        %v742 = vld [vmem:[#allocation9 + $0x58] sm:$0xf]
        %v743 = vld [vmem:[#allocation9 + $0x5c] sm:$0xf]
        %v744 = vld [vmem:[#allocation9 + $0x60] sm:$0xf]
        %v745 = vld [vmem:[#allocation9 + $0x64] sm:$0xf]
        %v746 = vld [vmem:[#allocation9 + $0x68] sm:$0xf]
        %v747 = vld [vmem:[#allocation9 + $0x6c] sm:$0xf]
        %v748 = vld [vmem:[#allocation9 + $0x70] sm:$0xf]
        %v749 = vld [vmem:[#allocation9 + $0x74] sm:$0xf]
        %v750 = vld [vmem:[#allocation9 + $0x78] sm:$0xf]
        %v751 = vld [vmem:[#allocation9 + $0x7c] sm:$0xf]
        %v784 = vunpack.c.l.b16 %v720
        %v785 = vunpack.c.l.b16 %v721
        %v786 = vunpack.c.l.b16 %v722
        %v787 = vunpack.c.l.b16 %v723
        %v788 = vunpack.c.l.b16 %v724
        %v789 = vunpack.c.l.b16 %v725
        %v790 = vunpack.c.l.b16 %v726
        %v791 = vunpack.c.l.b16 %v727
        %v792 = vunpack.c.l.b16 %v728
        %v793 = vunpack.c.l.b16 %v729
        %v794 = vunpack.c.l.b16 %v730
        %v795 = vunpack.c.l.b16 %v731
        %v796 = vunpack.c.l.b16 %v732
        %v797 = vunpack.c.l.b16 %v733
        %v798 = vunpack.c.l.b16 %v734
        %v799 = vunpack.c.l.b16 %v735
        %v800 = vunpack.c.l.b16 %v736
        %v801 = vunpack.c.l.b16 %v737
        %v802 = vunpack.c.l.b16 %v738
        %v803 = vunpack.c.l.b16 %v739
        %v804 = vunpack.c.l.b16 %v740
        %v805 = vunpack.c.l.b16 %v741
        %v806 = vunpack.c.l.b16 %v742
        %v807 = vunpack.c.l.b16 %v743
        %v808 = vunpack.c.l.b16 %v744
        %v809 = vunpack.c.l.b16 %v745
        %v810 = vunpack.c.l.b16 %v746
        %v811 = vunpack.c.l.b16 %v747
        %v812 = vunpack.c.l.b16 %v748
        %v813 = vunpack.c.l.b16 %v749
        %v814 = vunpack.c.l.b16 %v750
        %v815 = vunpack.c.l.b16 %v751
        %v816 = vpack.c.b16 %v785, %v784
        %v817 = vpack.c.b16 %v787, %v786
        %v818 = vpack.c.b16 %v789, %v788
        %v819 = vpack.c.b16 %v791, %v790
        %v820 = vpack.c.b16 %v793, %v792
        %v821 = vpack.c.b16 %v795, %v794
        %v822 = vpack.c.b16 %v797, %v796
        %v823 = vpack.c.b16 %v799, %v798
        %v824 = vpack.c.b16 %v801, %v800
        %v825 = vpack.c.b16 %v803, %v802
        %v826 = vpack.c.b16 %v805, %v804
        %v827 = vpack.c.b16 %v807, %v806
        %v828 = vpack.c.b16 %v809, %v808
        %v829 = vpack.c.b16 %v811, %v810
        %v830 = vpack.c.b16 %v813, %v812
        %v831 = vpack.c.b16 %v815, %v814
        %848 = vmatprep.subr.bf16.mxu0 0
        %849 = vmatpush1.bf16.msra.mxu0 %v816
        %850 = vmatprep.subr.bf16.mxu0 0
        %851 = vmatpush1.bf16.msra.mxu0 %v817
        %852 = vmatprep.subr.bf16.mxu0 0
        %853 = vmatpush1.bf16.msra.mxu0 %v818
        %854 = vmatprep.subr.bf16.mxu0 0
        %855 = vmatpush1.bf16.msra.mxu0 %v819
        %856 = vmatprep.subr.bf16.mxu0 0
        %857 = vmatpush1.bf16.msra.mxu0 %v820
        %858 = vmatprep.subr.bf16.mxu0 0
        %859 = vmatpush1.bf16.msra.mxu0 %v821
        %860 = vmatprep.subr.bf16.mxu0 0
        %861 = vmatpush1.bf16.msra.mxu0 %v822
        %862 = vmatprep.subr.bf16.mxu0 0
        %863 = vmatpush1.bf16.msra.mxu0 %v823
        %864 = vmatprep.subr.bf16.mxu0 0
        %865 = vmatpush1.bf16.msra.mxu0 %v824
        %866 = vmatprep.subr.bf16.mxu0 0
        %867 = vmatpush1.bf16.msra.mxu0 %v825
        %868 = vmatprep.subr.bf16.mxu0 0
        %869 = vmatpush1.bf16.msra.mxu0 %v826
        %870 = vmatprep.subr.bf16.mxu0 0
        %871 = vmatpush1.bf16.msra.mxu0 %v827
        %872 = vmatprep.subr.bf16.mxu0 0
        %873 = vmatpush1.bf16.msra.mxu0 %v828
        %874 = vmatprep.subr.bf16.mxu0 0
        %875 = vmatpush1.bf16.msra.mxu0 %v829
        %876 = vmatprep.subr.bf16.mxu0 0
        %877 = vmatpush1.bf16.msra.mxu0 %v830
        %878 = vmatprep.subr.bf16.mxu0 0
        %879 = vmatpush1.bf16.msra.mxu0 %v831
        %880 = vmatprep.mubr.bf16.mxu0 %v717
        %881 = vmatmul.mubr.bf16.gmra.mrb[0].mxu0 %v716
        %v882 = vpop.f32.mrb[0].mxu0
        %v883 = vadd.f32 0.0, %v882
        %v884 = vpop.f32.mrb[0].mxu0
        %v885 = vpop.f32.mrb[0].mxu0
        %v886 = vadd.f32 0.0, %v885
        %v887 = vpop.f32.mrb[0].mxu0
        %888 = vmatprep.mubr.bf16.mxu0 %v719
        %889 = vmatmul.mubr.bf16.gmra.mrb[0].mxu0 %v718
        %v890 = vpop.f32.mrb[0].mxu0
        %v891 = vadd.f32 0.0, %v890
        %v892 = vpop.f32.mrb[0].mxu0
        %v893 = vpop.f32.mrb[0].mxu0
        %v894 = vadd.f32 0.0, %v893
        %v895 = vpop.f32.mrb[0].mxu0
        %896 = vdwg.mxu0
        %s897 = sld [smem:[#allocation11]]
        %s898 = sld [smem:[#allocation11 + $0x1]]
        %s899 = sld [smem:[#allocation11 + $0x2]]
        %v900 = vstv %s897
        %v901 = vadd.f32 %v883, %v900
        %v902 = vadd.f32 %v886, %v900
        %v903 = vadd.f32 %v891, %v900
        %v904 = vadd.f32 %v894, %v900
        %v905 = vmax.f32 %v901, 0.0
        %v906 = vmax.f32 %v902, 0.0
        %v907 = vmax.f32 %v903, 0.0
        %v908 = vmax.f32 %v904, 0.0
        %v909 = vstv %s898
        %v910 = vmul.f32 %v905, %v909
        %v911 = vmul.f32 %v906, %v909
        %v912 = vmul.f32 %v907, %v909
        %v913 = vmul.f32 %v908, %v909
        %v914 = vstv %s899
        %v915 = vadd.f32 %v910, %v914
        %v916 = vadd.f32 %v911, %v914
        %v917 = vadd.f32 %v912, %v914
        %v918 = vadd.f32 %v913, %v914
        %v919 = vxor.u32 %v915, 2147483648
        %v920 = vxor.u32 %v916, 2147483648
        %v921 = vxor.u32 %v917, 2147483648
        %v922 = vxor.u32 %v918, 2147483648
        %v923 = vmul.f32 %v919, 1.442695
        %v924 = vpow.pop %v923
        %v925 = vmul.f32 %v920, 1.442695
        %v926 = vpow.pop %v925
        %v927 = vmul.f32 %v921, 1.442695
        %v928 = vpow.pop %v927
        %v929 = vmul.f32 %v922, 1.442695
        %v930 = vpow.pop %v929
        %v931 = vadd.f32 %v924, 1.0
        %v932 = vadd.f32 %v926, 1.0
        %v933 = vadd.f32 %v928, 1.0
        %v934 = vadd.f32 %v930, 1.0
        %v935 = vrcp.pop %v931
        %v936 = vmul.f32 1.0, %v935
        %v937 = vrcp.pop %v932
        %v938 = vmul.f32 1.0, %v937
        %v939 = vrcp.pop %v933
        %v940 = vmul.f32 1.0, %v939
        %v941 = vrcp.pop %v934
        %v942 = vmul.f32 1.0, %v941
        %v943 = vadd.f32 %v936, %v940
        %v944 = vadd.f32 %v938, %v942
        %v945 = vrcp.pop %v943
        %v946 = vrcp.pop %v944
        %v947 = vmul.f32 %v936, %v945
        %v948 = vmul.f32 %v938, %v946
        %v949 = vmul.f32 %v940, %v945
        %v950 = vmul.f32 %v942, %v946
        %v951 = vpack.c.bf16 %v948, %v947
        %953 = vset.pattern.permute.xlu0 0
        %954 = vperm.xlu0 %953, %v951
        %v955 = vpop.permute.xlu0 %954
        %v957 = vmul.bf16 %v955, %v716
        %v958 = vmul.bf16 %v955, %v717
        %v959 = vpack.c.bf16 %v950, %v949
        %961 = vset.pattern.permute.xlu0 0
        %962 = vperm.xlu0 %961, %v959
        %v963 = vpop.permute.xlu0 %962
        %v965 = vmul.bf16 %v963, %v718
        %v966 = vmul.bf16 %v963, %v719
        %v967 = vadd.bf16 %v957, %v965
        %v968 = vadd.bf16 %v958, %v966
        %v969 = vld [vmem:[#allocation12] sm:$0xff]
        %v970 = vld [vmem:[#allocation12 + $0x8] sm:$0xff]
        %v971 = vld [vmem:[#allocation12 + $0x10] sm:$0xff]
        %v972 = vld [vmem:[#allocation12 + $0x18] sm:$0xff]
        %v973 = vld [vmem:[#allocation12 + $0x20] sm:$0xff]
        %v974 = vld [vmem:[#allocation12 + $0x28] sm:$0xff]
        %v975 = vld [vmem:[#allocation12 + $0x30] sm:$0xff]
        %v976 = vld [vmem:[#allocation12 + $0x38] sm:$0xff]
        %v977 = vld [vmem:[#allocation12 + $0x40] sm:$0xff]
        %v978 = vld [vmem:[#allocation12 + $0x48] sm:$0xff]
        %v979 = vld [vmem:[#allocation12 + $0x50] sm:$0xff]
        %v980 = vld [vmem:[#allocation12 + $0x58] sm:$0xff]
        %v981 = vld [vmem:[#allocation12 + $0x60] sm:$0xff]
        %v982 = vld [vmem:[#allocation12 + $0x68] sm:$0xff]
        %v983 = vld [vmem:[#allocation12 + $0x70] sm:$0xff]
        %v984 = vld [vmem:[#allocation12 + $0x78] sm:$0xff]
        %v985 = vld [vmem:[#allocation12 + $0x80] sm:$0xff]
        %v986 = vld [vmem:[#allocation12 + $0x88] sm:$0xff]
        %v987 = vld [vmem:[#allocation12 + $0x90] sm:$0xff]
        %v988 = vld [vmem:[#allocation12 + $0x98] sm:$0xff]
        %v989 = vld [vmem:[#allocation12 + $0xa0] sm:$0xff]
        %v990 = vld [vmem:[#allocation12 + $0xa8] sm:$0xff]
        %v991 = vld [vmem:[#allocation12 + $0xb0] sm:$0xff]
        %v992 = vld [vmem:[#allocation12 + $0xb8] sm:$0xff]
        %v993 = vld [vmem:[#allocation12 + $0xc0] sm:$0xff]
        %v994 = vld [vmem:[#allocation12 + $0xc8] sm:$0xff]
        %v995 = vld [vmem:[#allocation12 + $0xd0] sm:$0xff]
        %v996 = vld [vmem:[#allocation12 + $0xd8] sm:$0xff]
        %v997 = vld [vmem:[#allocation12 + $0xe0] sm:$0xff]
        %v998 = vld [vmem:[#allocation12 + $0xe8] sm:$0xff]
        %v999 = vld [vmem:[#allocation12 + $0xf0] sm:$0xff]
        %v1000 = vld [vmem:[#allocation12 + $0xf8] sm:$0xff]
        %v1001 = vld [vmem:[%s7] sm:$0x3]
        %v1003 = vlaneseq
        %v1004 = vshrl.u32 %v1003, 7
        %v1005 = vsub.s32 0, %v1004
        %v1006 = vrot.slane %v1001, %v1005
        %v1007 = vlaneseq
        %v1008 = vshrl.u32 %v1007, 7
        %v1009 = vsub.s32 1, %v1008
        %v1010 = vrot.slane %v1001, %v1009
        %v1045 = vunpack.c.l.b16 %v969
        %v1046 = vunpack.c.h.b16 %v969
        %v1047 = vunpack.c.l.b16 %v970
        %v1048 = vunpack.c.h.b16 %v970
        %v1049 = vunpack.c.l.b16 %v971
        %v1050 = vunpack.c.h.b16 %v971
        %v1051 = vunpack.c.l.b16 %v972
        %v1052 = vunpack.c.h.b16 %v972
        %v1053 = vunpack.c.l.b16 %v973
        %v1054 = vunpack.c.h.b16 %v973
        %v1055 = vunpack.c.l.b16 %v974
        %v1056 = vunpack.c.h.b16 %v974
        %v1057 = vunpack.c.l.b16 %v975
        %v1058 = vunpack.c.h.b16 %v975
        %v1059 = vunpack.c.l.b16 %v976
        %v1060 = vunpack.c.h.b16 %v976
        %v1061 = vunpack.c.l.b16 %v977
        %v1062 = vunpack.c.h.b16 %v977
        %v1063 = vunpack.c.l.b16 %v978
        %v1064 = vunpack.c.h.b16 %v978
        %v1065 = vunpack.c.l.b16 %v979
        %v1066 = vunpack.c.h.b16 %v979
        %v1067 = vunpack.c.l.b16 %v980
        %v1068 = vunpack.c.h.b16 %v980
        %v1069 = vunpack.c.l.b16 %v981
        %v1070 = vunpack.c.h.b16 %v981
        %v1071 = vunpack.c.l.b16 %v982
        %v1072 = vunpack.c.h.b16 %v982
        %v1073 = vunpack.c.l.b16 %v983
        %v1074 = vunpack.c.h.b16 %v983
        %v1075 = vunpack.c.l.b16 %v984
        %v1076 = vunpack.c.h.b16 %v984
        %v1077 = vunpack.c.l.b16 %v985
        %v1078 = vunpack.c.h.b16 %v985
        %v1079 = vunpack.c.l.b16 %v986
        %v1080 = vunpack.c.h.b16 %v986
        %v1081 = vunpack.c.l.b16 %v987
        %v1082 = vunpack.c.h.b16 %v987
        %v1083 = vunpack.c.l.b16 %v988
        %v1084 = vunpack.c.h.b16 %v988
        %v1085 = vunpack.c.l.b16 %v989
        %v1086 = vunpack.c.h.b16 %v989
        %v1087 = vunpack.c.l.b16 %v990
        %v1088 = vunpack.c.h.b16 %v990
        %v1089 = vunpack.c.l.b16 %v991
        %v1090 = vunpack.c.h.b16 %v991
        %v1091 = vunpack.c.l.b16 %v992
        %v1092 = vunpack.c.h.b16 %v992
        %v1093 = vunpack.c.l.b16 %v993
        %v1094 = vunpack.c.h.b16 %v993
        %v1095 = vunpack.c.l.b16 %v994
        %v1096 = vunpack.c.h.b16 %v994
        %v1097 = vunpack.c.l.b16 %v995
        %v1098 = vunpack.c.h.b16 %v995
        %v1099 = vunpack.c.l.b16 %v996
        %v1100 = vunpack.c.h.b16 %v996
        %v1101 = vunpack.c.l.b16 %v997
        %v1102 = vunpack.c.h.b16 %v997
        %v1103 = vunpack.c.l.b16 %v998
        %v1104 = vunpack.c.h.b16 %v998
        %v1105 = vunpack.c.l.b16 %v999
        %v1106 = vunpack.c.h.b16 %v999
        %v1107 = vunpack.c.l.b16 %v1000
        %v1108 = vunpack.c.h.b16 %v1000
        %v1109 = vpack.c.b16 %v1047, %v1045
        %v1110 = vpack.c.b16 %v1048, %v1046
        %v1111 = vpack.c.b16 %v1051, %v1049
        %v1112 = vpack.c.b16 %v1052, %v1050
        %v1113 = vpack.c.b16 %v1055, %v1053
        %v1114 = vpack.c.b16 %v1056, %v1054
        %v1115 = vpack.c.b16 %v1059, %v1057
        %v1116 = vpack.c.b16 %v1060, %v1058
        %v1117 = vpack.c.b16 %v1063, %v1061
        %v1118 = vpack.c.b16 %v1064, %v1062
        %v1119 = vpack.c.b16 %v1067, %v1065
        %v1120 = vpack.c.b16 %v1068, %v1066
        %v1121 = vpack.c.b16 %v1071, %v1069
        %v1122 = vpack.c.b16 %v1072, %v1070
        %v1123 = vpack.c.b16 %v1075, %v1073
        %v1124 = vpack.c.b16 %v1076, %v1074
        %v1125 = vpack.c.b16 %v1079, %v1077
        %v1126 = vpack.c.b16 %v1080, %v1078
        %v1127 = vpack.c.b16 %v1083, %v1081
        %v1128 = vpack.c.b16 %v1084, %v1082
        %v1129 = vpack.c.b16 %v1087, %v1085
        %v1130 = vpack.c.b16 %v1088, %v1086
        %v1131 = vpack.c.b16 %v1091, %v1089
        %v1132 = vpack.c.b16 %v1092, %v1090
        %v1133 = vpack.c.b16 %v1095, %v1093
        %v1134 = vpack.c.b16 %v1096, %v1094
        %v1135 = vpack.c.b16 %v1099, %v1097
        %v1136 = vpack.c.b16 %v1100, %v1098
        %v1137 = vpack.c.b16 %v1103, %v1101
        %v1138 = vpack.c.b16 %v1104, %v1102
        %v1139 = vpack.c.b16 %v1107, %v1105
        %v1140 = vpack.c.b16 %v1108, %v1106
        %1173 = vmatprep.subr.bf16.mxu0 %v1110
        %1174 = vmatpush1.bf16.msra.mxu0 %v1109
        %1175 = vmatprep.subr.bf16.mxu0 %v1112
        %1176 = vmatpush1.bf16.msra.mxu0 %v1111
        %1177 = vmatprep.subr.bf16.mxu0 %v1114
        %1178 = vmatpush1.bf16.msra.mxu0 %v1113
        %1179 = vmatprep.subr.bf16.mxu0 %v1116
        %1180 = vmatpush1.bf16.msra.mxu0 %v1115
        %1181 = vmatprep.subr.bf16.mxu0 %v1118
        %1182 = vmatpush1.bf16.msra.mxu0 %v1117
        %1183 = vmatprep.subr.bf16.mxu0 %v1120
        %1184 = vmatpush1.bf16.msra.mxu0 %v1119
        %1185 = vmatprep.subr.bf16.mxu0 %v1122
        %1186 = vmatpush1.bf16.msra.mxu0 %v1121
        %1187 = vmatprep.subr.bf16.mxu0 %v1124
        %1188 = vmatpush1.bf16.msra.mxu0 %v1123
        %1189 = vmatprep.subr.bf16.mxu0 %v1126
        %1190 = vmatpush1.bf16.msra.mxu0 %v1125
        %1191 = vmatprep.subr.bf16.mxu0 %v1128
        %1192 = vmatpush1.bf16.msra.mxu0 %v1127
        %1193 = vmatprep.subr.bf16.mxu0 %v1130
        %1194 = vmatpush1.bf16.msra.mxu0 %v1129
        %1195 = vmatprep.subr.bf16.mxu0 %v1132
        %1196 = vmatpush1.bf16.msra.mxu0 %v1131
        %1197 = vmatprep.subr.bf16.mxu0 %v1134
        %1198 = vmatpush1.bf16.msra.mxu0 %v1133
        %1199 = vmatprep.subr.bf16.mxu0 %v1136
        %1200 = vmatpush1.bf16.msra.mxu0 %v1135
        %1201 = vmatprep.subr.bf16.mxu0 %v1138
        %1202 = vmatpush1.bf16.msra.mxu0 %v1137
        %1203 = vmatprep.subr.bf16.mxu0 %v1140
        %1204 = vmatpush1.bf16.msra.mxu0 %v1139
        %1205 = vmatprep.mubr.bf16.mxu0 %v968
        %1206 = vmatmul.mubr.bf16.gmra.mrb[0].mxu0 %v967
        %v1207 = vpop.f32.mrb[0].mxu0
        %v1208 = vadd.f32 %v1006, %v1207
        %v1209 = vpop.f32.mrb[0].mxu0
        %v1210 = vadd.f32 %v1010, %v1209
        %v1211 = vpop.f32.mrb[0].mxu0
        %v1212 = vadd.f32 %v1006, %v1211
        %v1213 = vpop.f32.mrb[0].mxu0
        %v1214 = vadd.f32 %v1010, %v1213
        %1215 = vdwg.mxu0
        %1216 = vst [vmem:[%s422] sm:$0xff] %v1208
        %1217 = vst [vmem:[%s422 + $0x8] sm:$0xff] %v1210
        %1218 = vst [vmem:[%s422 + $0x10] sm:$0xff] %v1212
        %1219 = vst [vmem:[%s422 + $0x18] sm:$0xff] %v1214
        %s1220 = sand.u32 %s216, 1
        %s1221 = scalar_lea.sflag [#allocation4], %s1220
        %s1222 = sand.u32 %s216, 1
        %s1223 = smul.addr %s1222, 32
        %s1224 = scalar_lea.vmem [#allocation13], %s1223
        // Predicated region
        $region77: #{tpu_custom_call.1} parent=51 // pred_check
          %p1225 = pneg %p226
        $region78: #{tpu_custom_call.1} parent=51 // pred_check_branch
          %1227 = sbr.rel (%p1225) target = $region80
        $region79: #{tpu_custom_call.1} parent=51 // pred_region
          %s1228 = smul.u32 2, %s30
          %s1230 = ssub.s32 512, 512
          %1231 = vsyncadd %s1221, %s1230
          %s1232 = smul.addr %s1228, 2
          %s1233 = smul.addr %s1232, 128
          %s1234 = scalar_lea.hbm %s8, %s1233
          %s1235 = sshll.u32 %s1224, 4
          %s1236 = int_to_ptr.vmem [resolvable:$true] %s1235
          %1241 = dma.vmem_to_hbm [thread:$0]  %s1236, 512, %s1234, %s1221, 256, 256, 16
        $region80: #{tpu_custom_call.1} parent=51 // pred_fallthru
          _
      $region52: #{tpu_custom_call.1} parent=5 // pred_fallthru
        _
      %p1242 = scmp.le.s32.totalorder 2, %s25
      // Predicated region
      $region81: #{tpu_custom_call.1} parent=5 // pred_check
        %p1243 = pneg %p1242
      $region82: #{tpu_custom_call.1} parent=5 // pred_check_branch
        %1245 = sbr.rel (%p1243) target = $region84
      $region83: #{tpu_custom_call.1} parent=5 // pred_region
        %s1246 = ssub.s32 %s25, 2
        // Predicated region
        $region85: #{tpu_custom_call.1} parent=83 // pred_check
          %p1247 = pneg %p232
        $region86: #{tpu_custom_call.1} parent=83 // pred_check_branch
          %1249 = sbr.rel (%p1247) target = $region88
        $region87: #{tpu_custom_call.1} parent=83 // pred_region
          %s1250 = sand.u32 %s217, 1
          %s1251 = scalar_lea.sflag [#allocation4], %s1250
          %s1252 = sand.u32 %s217, 1
          %s1253 = smul.addr %s1252, 32
          %s1254 = scalar_lea.vmem [#allocation13], %s1253
          %1255 = dma.done %s1251, 512
        $region88: #{tpu_custom_call.1} parent=83 // pred_fallthru
          _
      $region84: #{tpu_custom_call.1} parent=5 // pred_fallthru
        _
    $region6: #{tpu_custom_call.1} parent=1 // loop_footer
      %s29 = sadd.s32 1, %s25
    $region7: #{tpu_custom_call.1} parent=1 // loop_footer_branch
      %24 = sbr.rel target = $region3
    $region8: #{tpu_custom_call.1} parent=1 // loop_exit
      _
    %1256 = vsyncpa [#allocation3], 1
    %s1257 = scalar_lea.sflag [#allocation3], 1
    %1258 = vsyncpa %s1257, 1
    %1259 = vsyncpa [#allocation7], 1
    %s1260 = scalar_lea.sflag [#allocation7], 1
    %1261 = vsyncpa %s1260, 1
    %1262 = vsyncpa [#allocation10], 1
    %1263 = vsyncpa [#allocation4], 1
    %s1264 = scalar_lea.sflag [#allocation4], 1
    %1265 = vsyncpa %s1264, 1
    %1266 = vsyncpa [#allocation5], 1
    %s1267 = scalar_lea.sflag [#allocation5], 1
    %1268 = vsyncpa %s1267, 1

// kernel: tpu_custom_call.1
$region0: #{tpu_custom_call.1}
  #allocation0 [shape = 'u32[]', space=smem, size = 0x4, offset = 0x4, fixed_abs, tag = 'smem constant byte address 0x4 - core index']
  #allocation1 [shape = 'u32[144,128]{1,0:T(1,128)}', space=vmem, size = 0x12000, scoped, tag = 'internal scratch']
  %s0 = inlined_call_operand.hbm [shape: bf16[32,256], index: 0, kind: input, shape index: {}]
  %s1 = inlined_call_operand.hbm [shape: bf16[32,256], index: 1, kind: input, shape index: {}]
  %s2 = inlined_call_operand.hbm [shape: bf16[256,256], index: 2, kind: input, shape index: {}]
  %s3 = inlined_call_operand.vmem [shape: f32[1,256], index: 3, kind: input, shape index: {}]
  %s4 = inlined_call_operand.hbm [shape: bf16[256,128], index: 4, kind: input, shape index: {}]
  %s5 = inlined_call_operand.vmem [shape: f32[3], index: 5, kind: input, shape index: {}]
  %s6 = inlined_call_operand.hbm [shape: bf16[256,256], index: 6, kind: input, shape index: {}]
  %s7 = inlined_call_operand.vmem [shape: f32[1,256], index: 7, kind: input, shape index: {}]
  %s8 = inlined_call_operand.hbm [shape: f32[32,256], index: 8, kind: output, shape index: {}]
  %s9 = sld [smem:[#allocation0]]
  $region89: #{tpu_custom_call.1} parent=0
    _
  %s11 = ssub.s32 1, %s9
  %s12 = scalar_select 0, %s11, %s9
  $region1: #{tpu_custom_call.1} parent=0
    #allocation2 [shape = 'u8[16384]{0}', space=vmem, size = 0x4000, scoped, tag = 'input window, operand 0']
    #allocation3 [shape = 's32[2]{0}', space=sflag, size = 0x8, scoped, tag = 'scoped memory for tpu_custom_call.1']
    #allocation4 [shape = 's32[2]{0}', space=sflag, size = 0x8, scoped, tag = 'scoped memory for tpu_custom_call.1']
    #allocation5 [shape = 's32[2]{0}', space=sflag, size = 0x8, scoped, tag = 'scoped memory for tpu_custom_call.1']
    #allocation6 [shape = 'u8[16384]{0}', space=vmem, size = 0x4000, scoped, tag = 'input window, operand 1']
    #allocation7 [shape = 's32[2]{0}', space=sflag, size = 0x8, scoped, tag = 'scoped memory for tpu_custom_call.1']
    #allocation8 [shape = 'u8[131072]{0}', space=vmem, size = 0x20000, scoped, tag = 'input window, operand 2, single buffered']
    #allocation9 [shape = 'u8[65536]{0}', space=vmem, size = 0x10000, scoped, tag = 'input window, operand 4, single buffered']
    #allocation10 [shape = 's32[1]{0}', space=sflag, size = 0x4, scoped, tag = 'scoped memory for tpu_custom_call.1']
    #allocation11 [shape = 'u8[512]{0}', space=smem, size = 0x200, scoped, tag = 'input window, operand 5, single buffered']
    #allocation12 [shape = 'u8[131072]{0}', space=vmem, size = 0x20000, scoped, tag = 'input window, operand 6, single buffered']
    #allocation13 [shape = 'u8[32768]{0}', space=vmem, size = 0x8000, scoped, tag = 'output window, operand 0']
    %13 = vsyncpa [#allocation3], 0
    %s14 = scalar_lea.sflag [#allocation3], 1
    %15 = vsyncpa %s14, 0
    %16 = vsyncpa [#allocation7], 0
    %s17 = scalar_lea.sflag [#allocation7], 1
    %18 = vsyncpa %s17, 0
    %19 = vsyncpa [#allocation10], 0
    %20 = vsyncpa [#allocation5], 0
    %21 = vsyncpa [#allocation4], 0
    %s22 = scalar_lea.sflag [#allocation4], 1
    %23 = vsyncpa %s22, 0
    loop: start=0, step=1, limit=4
    $region2: #{tpu_custom_call.1} parent=1 // loop_pre_header
      _
    $region3: #{tpu_custom_call.1} parent=1 // loop_header
      %s25 = sphi 0, %s29
      %p26 = scmp.ge.s32.totalorder %s25, 4
      %s35 = sphi 0, %s37
      %s38 = sphi 0, %s35
      %s39 = sphi 0, %s38
      %s55 = sphi 0, %s39
      %s61 = sphi 0, %s63
      %s64 = sphi 0, %s61
      %s65 = sphi 0, %s64
      %s81 = sphi 0, %s65
      %s85 = sphi 0, %s85
      %s87 = sphi 0, %s85
      %s88 = sphi 0, %s87
      %s102 = sphi 0, %s88
      %s106 = sphi 0, %s106
      %s108 = sphi 0, %s106
      %s109 = sphi 0, %s108
      %s123 = sphi 0, %s109
      %s127 = sphi 0, %s127
      %s129 = sphi 0, %s127
      %s130 = sphi 0, %s129
      %s144 = sphi 0, %s130
      %s148 = sphi 0, %s148
      %s150 = sphi 0, %s148
      %s151 = sphi 0, %s150
      %s165 = sphi 0, %s151
      %s169 = sphi 0, %s169
      %s171 = sphi 0, %s169
      %s172 = sphi 0, %s171
      %s186 = sphi 0, %s172
      %s190 = sphi 0, %s190
      %s192 = sphi 0, %s190
      %s193 = sphi 0, %s192
      %s207 = sphi 0, %s193
      %s213 = sphi 0, %s215
      %s216 = sphi 0, %s213
      %s217 = sphi 0, %s216
      %s233 = sphi 0, %s217
    $region4: #{tpu_custom_call.1} parent=1 // loop_header_branch
      %28 = sbr.rel (%p26) target = $region8
    $region5: #{tpu_custom_call.1} parent=1 // loop_body
      %s30 = ssub.s32 %s25, 1
      %s31 = ssub.s32 %s25, 2
      %s32 = sadd.s32 %s25, 1
      %s33 = ssub.s32 %s25, %s32
      %p34 = scmp.eq.s32.totalorder %s33, 0
      %s36 = sadd.s32 %s35, 1
      %s37 = scalar_select %p34, %s35, %s36
      %p40 = pneg %p34
      %p41 = scmp.eq.s32.totalorder %s25, 1
      %p42 = por %p40, %p41
      %p43 = scmp.ne.s32.totalorder %s35, %s38
      %p44 = scmp.eq.s32.totalorder %s25, 0
      %p45 = por %p43, %p44
      %p46 = scmp.ne.s32.totalorder %s35, %s38
      %p47 = scmp.eq.s32.totalorder %s30, 1
      %p48 = por %p46, %p47
      %p49 = scmp.ne.s32.totalorder %s38, %s39
      %p50 = scmp.eq.s32.totalorder %s30, 0
      %p51 = por %p49, %p50
      %p52 = scmp.ne.s32.totalorder %s38, %s39
      %p53 = scmp.eq.s32.totalorder %s31, 1
      %p54 = por %p52, %p53
      %p56 = scmp.ne.s32.totalorder %s39, %s55
      %p57 = scmp.eq.s32.totalorder %s31, 0
      %p58 = por %p56, %p57
      %s59 = ssub.s32 %s25, %s32
      %p60 = scmp.eq.s32.totalorder %s59, 0
      %s62 = sadd.s32 %s61, 1
      %s63 = scalar_select %p60, %s61, %s62
      %p66 = pneg %p60
      %p67 = scmp.eq.s32.totalorder %s25, 1
      %p68 = por %p66, %p67
      %p69 = scmp.ne.s32.totalorder %s61, %s64
      %p70 = scmp.eq.s32.totalorder %s25, 0
      %p71 = por %p69, %p70
      %p72 = scmp.ne.s32.totalorder %s61, %s64
      %p73 = scmp.eq.s32.totalorder %s30, 1
      %p74 = por %p72, %p73
      %p75 = scmp.ne.s32.totalorder %s64, %s65
      %p76 = scmp.eq.s32.totalorder %s30, 0
      %p77 = por %p75, %p76
      %p78 = scmp.ne.s32.totalorder %s64, %s65
      %p79 = scmp.eq.s32.totalorder %s31, 1
      %p80 = por %p78, %p79
      %p82 = scmp.ne.s32.totalorder %s65, %s81
      %p83 = scmp.eq.s32.totalorder %s31, 0
      %p84 = por %p82, %p83
      %s86 = sadd.s32 %s85, 1
      %p89 = scmp.eq.s32.totalorder %s25, 1
      %p90 = scmp.ne.s32.totalorder %s85, %s87
      %p91 = scmp.eq.s32.totalorder %s25, 0
      %p92 = por %p90, %p91
      %p93 = scmp.ne.s32.totalorder %s85, %s87
      %p94 = scmp.eq.s32.totalorder %s30, 1
      %p95 = por %p93, %p94
      %p96 = scmp.ne.s32.totalorder %s87, %s88
      %p97 = scmp.eq.s32.totalorder %s30, 0
      %p98 = por %p96, %p97
      %p99 = scmp.ne.s32.totalorder %s87, %s88
      %p100 = scmp.eq.s32.totalorder %s31, 1
      %p101 = por %p99, %p100
      %p103 = scmp.ne.s32.totalorder %s88, %s102
      %p104 = scmp.eq.s32.totalorder %s31, 0
      %p105 = por %p103, %p104
      %s107 = sadd.s32 %s106, 1
      %p110 = scmp.eq.s32.totalorder %s25, 1
      %p111 = scmp.ne.s32.totalorder %s106, %s108
      %p112 = scmp.eq.s32.totalorder %s25, 0
      %p113 = por %p111, %p112
      %p114 = scmp.ne.s32.totalorder %s106, %s108
      %p115 = scmp.eq.s32.totalorder %s30, 1
      %p116 = por %p114, %p115
      %p117 = scmp.ne.s32.totalorder %s108, %s109
      %p118 = scmp.eq.s32.totalorder %s30, 0
      %p119 = por %p117, %p118
      %p120 = scmp.ne.s32.totalorder %s108, %s109
      %p121 = scmp.eq.s32.totalorder %s31, 1
      %p122 = por %p120, %p121
      %p124 = scmp.ne.s32.totalorder %s109, %s123
      %p125 = scmp.eq.s32.totalorder %s31, 0
      %p126 = por %p124, %p125
      %s128 = sadd.s32 %s127, 1
      %p131 = scmp.eq.s32.totalorder %s25, 1
      %p132 = scmp.ne.s32.totalorder %s127, %s129
      %p133 = scmp.eq.s32.totalorder %s25, 0
      %p134 = por %p132, %p133
      %p135 = scmp.ne.s32.totalorder %s127, %s129
      %p136 = scmp.eq.s32.totalorder %s30, 1
      %p137 = por %p135, %p136
      %p138 = scmp.ne.s32.totalorder %s129, %s130
      %p139 = scmp.eq.s32.totalorder %s30, 0
      %p140 = por %p138, %p139
      %p141 = scmp.ne.s32.totalorder %s129, %s130
      %p142 = scmp.eq.s32.totalorder %s31, 1
      %p143 = por %p141, %p142
      %p145 = scmp.ne.s32.totalorder %s130, %s144
      %p146 = scmp.eq.s32.totalorder %s31, 0
      %p147 = por %p145, %p146
      %s149 = sadd.s32 %s148, 1
      %p152 = scmp.eq.s32.totalorder %s25, 1
      %p153 = scmp.ne.s32.totalorder %s148, %s150
      %p154 = scmp.eq.s32.totalorder %s25, 0
      %p155 = por %p153, %p154
      %p156 = scmp.ne.s32.totalorder %s148, %s150
      %p157 = scmp.eq.s32.totalorder %s30, 1
      %p158 = por %p156, %p157
      %p159 = scmp.ne.s32.totalorder %s150, %s151
      %p160 = scmp.eq.s32.totalorder %s30, 0
      %p161 = por %p159, %p160
      %p162 = scmp.ne.s32.totalorder %s150, %s151
      %p163 = scmp.eq.s32.totalorder %s31, 1
      %p164 = por %p162, %p163
      %p166 = scmp.ne.s32.totalorder %s151, %s165
      %p167 = scmp.eq.s32.totalorder %s31, 0
      %p168 = por %p166, %p167
      %s170 = sadd.s32 %s169, 1
      %p173 = scmp.eq.s32.totalorder %s25, 1
      %p174 = scmp.ne.s32.totalorder %s169, %s171
      %p175 = scmp.eq.s32.totalorder %s25, 0
      %p176 = por %p174, %p175
      %p177 = scmp.ne.s32.totalorder %s169, %s171
      %p178 = scmp.eq.s32.totalorder %s30, 1
      %p179 = por %p177, %p178
      %p180 = scmp.ne.s32.totalorder %s171, %s172
      %p181 = scmp.eq.s32.totalorder %s30, 0
      %p182 = por %p180, %p181
      %p183 = scmp.ne.s32.totalorder %s171, %s172
      %p184 = scmp.eq.s32.totalorder %s31, 1
      %p185 = por %p183, %p184
      %p187 = scmp.ne.s32.totalorder %s172, %s186
      %p188 = scmp.eq.s32.totalorder %s31, 0
      %p189 = por %p187, %p188
      %s191 = sadd.s32 %s190, 1
      %p194 = scmp.eq.s32.totalorder %s25, 1
      %p195 = scmp.ne.s32.totalorder %s190, %s192
      %p196 = scmp.eq.s32.totalorder %s25, 0
      %p197 = por %p195, %p196
      %p198 = scmp.ne.s32.totalorder %s190, %s192
      %p199 = scmp.eq.s32.totalorder %s30, 1
      %p200 = por %p198, %p199
      %p201 = scmp.ne.s32.totalorder %s192, %s193
      %p202 = scmp.eq.s32.totalorder %s30, 0
      %p203 = por %p201, %p202
      %p204 = scmp.ne.s32.totalorder %s192, %s193
      %p205 = scmp.eq.s32.totalorder %s31, 1
      %p206 = por %p204, %p205
      %p208 = scmp.ne.s32.totalorder %s193, %s207
      %p209 = scmp.eq.s32.totalorder %s31, 0
      %p210 = por %p208, %p209
      %s211 = ssub.s32 %s25, %s32
      %p212 = scmp.eq.s32.totalorder %s211, 0
      %s214 = sadd.s32 %s213, 1
      %s215 = scalar_select %p212, %s213, %s214
      %p218 = pneg %p212
      %p219 = scmp.eq.s32.totalorder %s25, 1
      %p220 = por %p218, %p219
      %p221 = scmp.ne.s32.totalorder %s213, %s216
      %p222 = scmp.eq.s32.totalorder %s25, 0
      %p223 = por %p221, %p222
      %p224 = scmp.ne.s32.totalorder %s213, %s216
      %p225 = scmp.eq.s32.totalorder %s30, 1
      %p226 = por %p224, %p225
      %p227 = scmp.ne.s32.totalorder %s216, %s217
      %p228 = scmp.eq.s32.totalorder %s30, 0
      %p229 = por %p227, %p228
      %p230 = scmp.ne.s32.totalorder %s216, %s217
      %p231 = scmp.eq.s32.totalorder %s31, 1
      %p232 = por %p230, %p231
      %p234 = scmp.ne.s32.totalorder %s217, %s233
      %p235 = scmp.eq.s32.totalorder %s31, 0
      %p236 = por %p234, %p235
      %p237 = scmp.le.s32.totalorder 1, %s25
      %p238 = scmp.lt.s32.totalorder %s25, 3
      %p239 = pnand %p237, %p238
      %p240 = pneg %p239
      // Predicated region
      $region9: #{tpu_custom_call.1} parent=5 // pred_check
        _
      $region10: #{tpu_custom_call.1} parent=5 // pred_check_branch
        %242 = sbr.rel (%p239) target = $region12
      $region11: #{tpu_custom_call.1} parent=5 // pred_region
        %s243 = ssub.s32 %s25, 1
        // Predicated region
        $region13: #{tpu_custom_call.1} parent=11 // pred_check
          %p244 = pneg %p98
        $region14: #{tpu_custom_call.1} parent=11 // pred_check_branch
          %246 = sbr.rel (%p244) target = $region16
        $region15: #{tpu_custom_call.1} parent=11 // pred_region
          %s248 = ssub.s32 4096, 4096
          %249 = vsyncadd [#allocation7], %s248
          %s250 = sshll.u32 [#allocation8], 4
          %s251 = int_to_ptr.vmem [resolvable:$true] %s250
          %256 = dma.hbm_to_vmem [thread:$0]  %s2, 4096, %s251, [#allocation7], 128, 128, 8
        $region16: #{tpu_custom_call.1} parent=11 // pred_fallthru
          _
        // Predicated region
        $region17: #{tpu_custom_call.1} parent=11 // pred_check
          %p257 = pneg %p119
        $region18: #{tpu_custom_call.1} parent=11 // pred_check_branch
          %259 = sbr.rel (%p257) target = $region20
        $region19: #{tpu_custom_call.1} parent=11 // pred_region
          _
        $region20: #{tpu_custom_call.1} parent=11 // pred_fallthru
          _
        // Predicated region
        $region21: #{tpu_custom_call.1} parent=11 // pred_check
          %p260 = pneg %p140
        $region22: #{tpu_custom_call.1} parent=11 // pred_check_branch
          %262 = sbr.rel (%p260) target = $region24
        $region23: #{tpu_custom_call.1} parent=11 // pred_region
          %s264 = ssub.s32 2048, 2048
          %265 = vsyncadd [#allocation10], %s264
          %s266 = sshll.u32 [#allocation9], 4
          %s267 = int_to_ptr.vmem [resolvable:$true] %s266
          %272 = dma.hbm_to_vmem [thread:$0]  %s4, 2048, %s267, [#allocation10], 64, 64, 4
        $region24: #{tpu_custom_call.1} parent=11 // pred_fallthru
          _
        // Predicated region
        $region25: #{tpu_custom_call.1} parent=11 // pred_check
          %p273 = pneg %p161
        $region26: #{tpu_custom_call.1} parent=11 // pred_check_branch
          %275 = sbr.rel (%p273) target = $region28
        $region27: #{tpu_custom_call.1} parent=11 // pred_region
          %s277 = ssub.s32 16, 16
          %278 = vsyncadd [#allocation5], %s277
          %s280 = sshll.u32 %s5, 4
          %s281 = int_to_ptr.vmem [resolvable:$true] %s280
          %283 = dma.vmem_to_smem %s281, 16, [#allocation11], [#allocation5]
        $region28: #{tpu_custom_call.1} parent=11 // pred_fallthru
          _
        // Predicated region
        $region29: #{tpu_custom_call.1} parent=11 // pred_check
          %p284 = pneg %p182
        $region30: #{tpu_custom_call.1} parent=11 // pred_check_branch
          %286 = sbr.rel (%p284) target = $region32
        $region31: #{tpu_custom_call.1} parent=11 // pred_region
          %s288 = ssub.s32 4096, 4096
          %289 = vsyncadd [#allocation10], %s288
          %s290 = sshll.u32 [#allocation12], 4
          %s291 = int_to_ptr.vmem [resolvable:$true] %s290
          %296 = dma.hbm_to_vmem [thread:$0]  %s6, 4096, %s291, [#allocation10], 128, 128, 8
        $region32: #{tpu_custom_call.1} parent=11 // pred_fallthru
          _
        // Predicated region
        $region33: #{tpu_custom_call.1} parent=11 // pred_check
          %p297 = pneg %p203
        $region34: #{tpu_custom_call.1} parent=11 // pred_check_branch
          %299 = sbr.rel (%p297) target = $region36
        $region35: #{tpu_custom_call.1} parent=11 // pred_region
          _
        $region36: #{tpu_custom_call.1} parent=11 // pred_fallthru
          _
      $region12: #{tpu_custom_call.1} parent=5 // pred_fallthru
        _
      %p300 = scmp.lt.s32.totalorder %s25, 2
      // Predicated region
      $region37: #{tpu_custom_call.1} parent=5 // pred_check
        %p301 = pneg %p300
      $region38: #{tpu_custom_call.1} parent=5 // pred_check_branch
        %303 = sbr.rel (%p301) target = $region40
      $region39: #{tpu_custom_call.1} parent=5 // pred_region
        // Predicated region
        $region41: #{tpu_custom_call.1} parent=39 // pred_check
          %p304 = pneg %p45
        $region42: #{tpu_custom_call.1} parent=39 // pred_check_branch
          %306 = sbr.rel (%p304) target = $region44
        $region43: #{tpu_custom_call.1} parent=39 // pred_region
          %s307 = sand.u32 %s35, 1
          %s308 = scalar_lea.sflag [#allocation3], %s307
          %s309 = sand.u32 %s35, 1
          %s310 = smul.addr %s309, 16
          %s311 = scalar_lea.vmem [#allocation2], %s310
          %s312 = smul.u32 2, %s25
          %s314 = ssub.s32 256, 256
          %315 = vsyncadd %s308, %s314
          %s316 = smul.addr %s312, 2
          %s317 = smul.addr %s316, 64
          %s318 = scalar_lea.hbm %s0, %s317
          %s319 = sshll.u32 %s311, 4
          %s320 = int_to_ptr.vmem [resolvable:$true] %s319
          %325 = dma.hbm_to_vmem [thread:$0]  %s318, 256, %s320, %s308, 128, 128, 8
        $region44: #{tpu_custom_call.1} parent=39 // pred_fallthru
          _
        // Predicated region
        $region45: #{tpu_custom_call.1} parent=39 // pred_check
          %p326 = pneg %p71
        $region46: #{tpu_custom_call.1} parent=39 // pred_check_branch
          %328 = sbr.rel (%p326) target = $region48
        $region47: #{tpu_custom_call.1} parent=39 // pred_region
          %s329 = sand.u32 %s25, 1
          %s330 = scalar_lea.sflag [#allocation7], %s329
          %s331 = sand.u32 %s61, 1
          %s332 = smul.addr %s331, 16
          %s333 = scalar_lea.vmem [#allocation6], %s332
          %s334 = smul.u32 2, %s25
          %s336 = ssub.s32 256, 256
          %337 = vsyncadd %s330, %s336
          %s338 = smul.addr %s334, 2
          %s339 = smul.addr %s338, 64
          %s340 = scalar_lea.hbm %s1, %s339
          %s341 = sshll.u32 %s333, 4
          %s342 = int_to_ptr.vmem [resolvable:$true] %s341
          %347 = dma.hbm_to_vmem [thread:$0]  %s340, 256, %s342, %s330, 128, 128, 8
        $region48: #{tpu_custom_call.1} parent=39 // pred_fallthru
          _
      $region40: #{tpu_custom_call.1} parent=5 // pred_fallthru
        _
      %p348 = scmp.le.s32.totalorder 1, %s25
      %p349 = scmp.lt.s32.totalorder %s25, 3
      %p350 = pnand %p348, %p349
      %p351 = pneg %p350
      // Predicated region
      $region49: #{tpu_custom_call.1} parent=5 // pred_check
        _
      $region50: #{tpu_custom_call.1} parent=5 // pred_check_branch
        %353 = sbr.rel (%p350) target = $region52
      $region51: #{tpu_custom_call.1} parent=5 // pred_region
        %s354 = ssub.s32 %s25, 1
        %s355 = sand.u32 %s38, 1
        %s356 = scalar_lea.sflag [#allocation3], %s355
        %s357 = sand.u32 %s38, 1
        %s358 = smul.addr %s357, 16
        %s359 = scalar_lea.vmem [#allocation2], %s358
        // Predicated region
        $region53: #{tpu_custom_call.1} parent=51 // pred_check
          %p360 = pneg %p51
        $region54: #{tpu_custom_call.1} parent=51 // pred_check_branch
          %362 = sbr.rel (%p360) target = $region56
        $region55: #{tpu_custom_call.1} parent=51 // pred_region
          %363 = dma.done %s356, 256
        $region56: #{tpu_custom_call.1} parent=51 // pred_fallthru
          _
        %s364 = sand.u32 %s30, 1
        %s365 = scalar_lea.sflag [#allocation7], %s364
        %s366 = sand.u32 %s64, 1
        %s367 = smul.addr %s366, 16
        %s368 = scalar_lea.vmem [#allocation6], %s367
        // Predicated region
        $region57: #{tpu_custom_call.1} parent=51 // pred_check
          %p369 = pneg %p77
        $region58: #{tpu_custom_call.1} parent=51 // pred_check_branch
          %371 = sbr.rel (%p369) target = $region60
        $region59: #{tpu_custom_call.1} parent=51 // pred_region
          %372 = dma.done %s365, 256
        $region60: #{tpu_custom_call.1} parent=51 // pred_fallthru
          _
        // Predicated region
        $region61: #{tpu_custom_call.1} parent=51 // pred_check
          %p373 = pneg %p98
        $region62: #{tpu_custom_call.1} parent=51 // pred_check_branch
          %375 = sbr.rel (%p373) target = $region64
        $region63: #{tpu_custom_call.1} parent=51 // pred_region
          %376 = dma.done [#allocation7], 4096
        $region64: #{tpu_custom_call.1} parent=51 // pred_fallthru
          _
        // Predicated region
        $region65: #{tpu_custom_call.1} parent=51 // pred_check
          %p377 = pneg %p140
        $region66: #{tpu_custom_call.1} parent=51 // pred_check_branch
          %379 = sbr.rel (%p377) target = $region68
        $region67: #{tpu_custom_call.1} parent=51 // pred_region
          %380 = dma.done [#allocation10], 2048
        $region68: #{tpu_custom_call.1} parent=51 // pred_fallthru
          _
        // Predicated region
        $region69: #{tpu_custom_call.1} parent=51 // pred_check
          %p381 = pneg %p161
        $region70: #{tpu_custom_call.1} parent=51 // pred_check_branch
          %383 = sbr.rel (%p381) target = $region72
        $region71: #{tpu_custom_call.1} parent=51 // pred_region
          %384 = dma.done [#allocation5], 16
        $region72: #{tpu_custom_call.1} parent=51 // pred_fallthru
          _
        // Predicated region
        $region73: #{tpu_custom_call.1} parent=51 // pred_check
          %p385 = pneg %p182
        $region74: #{tpu_custom_call.1} parent=51 // pred_check_branch
          %387 = sbr.rel (%p385) target = $region76
        $region75: #{tpu_custom_call.1} parent=51 // pred_region
          %388 = dma.done [#allocation10], 4096
        $region76: #{tpu_custom_call.1} parent=51 // pred_fallthru
          _
        %389 = sfence
        %s390 = sand.u32 %s38, 1
        %s391 = scalar_lea.sflag [#allocation3], %s390
        %s392 = sand.u32 %s38, 1
        %s393 = smul.addr %s392, 16
        %s394 = scalar_lea.vmem [#allocation2], %s393
        %p395 = pneg %p51
        %p396 = pneg %p48
        %s397 = sand.u32 %s30, 1
        %s398 = scalar_lea.sflag [#allocation7], %s397
        %s399 = sand.u32 %s64, 1
        %s400 = smul.addr %s399, 16
        %s401 = scalar_lea.vmem [#allocation6], %s400
        %p402 = pneg %p77
        %p403 = pneg %p74
        %p404 = pneg %p98
        %p405 = pneg %p95
        %p406 = pneg %p119
        %p407 = pneg %p116
        %p408 = pneg %p140
        %p409 = pneg %p137
        %p410 = pneg %p161
        %p411 = pneg %p158
        %p412 = pneg %p182
        %p413 = pneg %p179
        %p414 = pneg %p203
        %p415 = pneg %p200
        %p416 = pneg %p229
        %p417 = pneg %p226
        %s418 = sand.u32 %s216, 1
        %s419 = scalar_lea.sflag [#allocation4], %s418
        %s420 = sand.u32 %s216, 1
        %s421 = smul.addr %s420, 32
        %s422 = scalar_lea.vmem [#allocation13], %s421
        %s423 = smul.u32 2, %s30
        %s424 = smul.u32 2, %s30
        %s425 = smul.u32 2, %s30
        %v427 = vld [vmem:[%s359] sm:$0xff]
        %v428 = vld [vmem:[%s359 + $0x8] sm:$0xff]
        %v429 = vld [vmem:[%s368] sm:$0xff]
        %v430 = vld [vmem:[%s368 + $0x8] sm:$0xff]
        %v433 = vunpack.c.l.b16 %v427
        %v434 = vunpack.c.h.b16 %v427
        %v435 = vunpack.c.l.b16 %v428
        %v436 = vunpack.c.h.b16 %v428
        %v437 = vpack.c.b16 %v435, %v433
        %v438 = vpack.c.b16 %v436, %v434
        %v443 = vunpack.c.l.b16 %v429
        %v444 = vunpack.c.h.b16 %v429
        %v445 = vunpack.c.l.b16 %v430
        %v446 = vunpack.c.h.b16 %v430
        %v447 = vpack.c.b16 %v445, %v443
        %v448 = vpack.c.b16 %v446, %v444
        %v451 = vld [vmem:[#allocation8] sm:$0xff]
        %v452 = vld [vmem:[#allocation8 + $0x8] sm:$0xff]
        %v453 = vld [vmem:[#allocation8 + $0x10] sm:$0xff]
        %v454 = vld [vmem:[#allocation8 + $0x18] sm:$0xff]
        %v455 = vld [vmem:[#allocation8 + $0x20] sm:$0xff]
        %v456 = vld [vmem:[#allocation8 + $0x28] sm:$0xff]
        %v457 = vld [vmem:[#allocation8 + $0x30] sm:$0xff]
        %v458 = vld [vmem:[#allocation8 + $0x38] sm:$0xff]
        %v459 = vld [vmem:[#allocation8 + $0x40] sm:$0xff]
        %v460 = vld [vmem:[#allocation8 + $0x48] sm:$0xff]
        %v461 = vld [vmem:[#allocation8 + $0x50] sm:$0xff]
        %v462 = vld [vmem:[#allocation8 + $0x58] sm:$0xff]
        %v463 = vld [vmem:[#allocation8 + $0x60] sm:$0xff]
        %v464 = vld [vmem:[#allocation8 + $0x68] sm:$0xff]
        %v465 = vld [vmem:[#allocation8 + $0x70] sm:$0xff]
        %v466 = vld [vmem:[#allocation8 + $0x78] sm:$0xff]
        %v467 = vld [vmem:[#allocation8 + $0x80] sm:$0xff]
        %v468 = vld [vmem:[#allocation8 + $0x88] sm:$0xff]
        %v469 = vld [vmem:[#allocation8 + $0x90] sm:$0xff]
        %v470 = vld [vmem:[#allocation8 + $0x98] sm:$0xff]
        %v471 = vld [vmem:[#allocation8 + $0xa0] sm:$0xff]
        %v472 = vld [vmem:[#allocation8 + $0xa8] sm:$0xff]
        %v473 = vld [vmem:[#allocation8 + $0xb0] sm:$0xff]
        %v474 = vld [vmem:[#allocation8 + $0xb8] sm:$0xff]
        %v475 = vld [vmem:[#allocation8 + $0xc0] sm:$0xff]
        %v476 = vld [vmem:[#allocation8 + $0xc8] sm:$0xff]
        %v477 = vld [vmem:[#allocation8 + $0xd0] sm:$0xff]
        %v478 = vld [vmem:[#allocation8 + $0xd8] sm:$0xff]
        %v479 = vld [vmem:[#allocation8 + $0xe0] sm:$0xff]
        %v480 = vld [vmem:[#allocation8 + $0xe8] sm:$0xff]
        %v481 = vld [vmem:[#allocation8 + $0xf0] sm:$0xff]
        %v482 = vld [vmem:[#allocation8 + $0xf8] sm:$0xff]
        %v483 = vld [vmem:[%s3] sm:$0x3]
        %v485 = vlaneseq
        %v486 = vshrl.u32 %v485, 7
        %v487 = vsub.s32 0, %v486
        %v488 = vrot.slane %v483, %v487
        %v489 = vlaneseq
        %v490 = vshrl.u32 %v489, 7
        %v491 = vsub.s32 1, %v490
        %v492 = vrot.slane %v483, %v491
        %v527 = vunpack.c.l.b16 %v451
        %v528 = vunpack.c.h.b16 %v451
        %v529 = vunpack.c.l.b16 %v452
        %v530 = vunpack.c.h.b16 %v452
        %v531 = vunpack.c.l.b16 %v453
        %v532 = vunpack.c.h.b16 %v453
        %v533 = vunpack.c.l.b16 %v454
        %v534 = vunpack.c.h.b16 %v454
        %v535 = vunpack.c.l.b16 %v455
        %v536 = vunpack.c.h.b16 %v455
        %v537 = vunpack.c.l.b16 %v456
        %v538 = vunpack.c.h.b16 %v456
        %v539 = vunpack.c.l.b16 %v457
        %v540 = vunpack.c.h.b16 %v457
        %v541 = vunpack.c.l.b16 %v458
        %v542 = vunpack.c.h.b16 %v458
        %v543 = vunpack.c.l.b16 %v459
        %v544 = vunpack.c.h.b16 %v459
        %v545 = vunpack.c.l.b16 %v460
        %v546 = vunpack.c.h.b16 %v460
        %v547 = vunpack.c.l.b16 %v461
        %v548 = vunpack.c.h.b16 %v461
        %v549 = vunpack.c.l.b16 %v462
        %v550 = vunpack.c.h.b16 %v462
        %v551 = vunpack.c.l.b16 %v463
        %v552 = vunpack.c.h.b16 %v463
        %v553 = vunpack.c.l.b16 %v464
        %v554 = vunpack.c.h.b16 %v464
        %v555 = vunpack.c.l.b16 %v465
        %v556 = vunpack.c.h.b16 %v465
        %v557 = vunpack.c.l.b16 %v466
        %v558 = vunpack.c.h.b16 %v466
        %v559 = vunpack.c.l.b16 %v467
        %v560 = vunpack.c.h.b16 %v467
        %v561 = vunpack.c.l.b16 %v468
        %v562 = vunpack.c.h.b16 %v468
        %v563 = vunpack.c.l.b16 %v469
        %v564 = vunpack.c.h.b16 %v469
        %v565 = vunpack.c.l.b16 %v470
        %v566 = vunpack.c.h.b16 %v470
        %v567 = vunpack.c.l.b16 %v471
        %v568 = vunpack.c.h.b16 %v471
        %v569 = vunpack.c.l.b16 %v472
        %v570 = vunpack.c.h.b16 %v472
        %v571 = vunpack.c.l.b16 %v473
        %v572 = vunpack.c.h.b16 %v473
        %v573 = vunpack.c.l.b16 %v474
        %v574 = vunpack.c.h.b16 %v474
        %v575 = vunpack.c.l.b16 %v475
        %v576 = vunpack.c.h.b16 %v475
        %v577 = vunpack.c.l.b16 %v476
        %v578 = vunpack.c.h.b16 %v476
        %v579 = vunpack.c.l.b16 %v477
        %v580 = vunpack.c.h.b16 %v477
        %v581 = vunpack.c.l.b16 %v478
        %v582 = vunpack.c.h.b16 %v478
        %v583 = vunpack.c.l.b16 %v479
        %v584 = vunpack.c.h.b16 %v479
        %v585 = vunpack.c.l.b16 %v480
        %v586 = vunpack.c.h.b16 %v480
        %v587 = vunpack.c.l.b16 %v481
        %v588 = vunpack.c.h.b16 %v481
        %v589 = vunpack.c.l.b16 %v482
        %v590 = vunpack.c.h.b16 %v482
        %v591 = vpack.c.b16 %v529, %v527
        %v592 = vpack.c.b16 %v530, %v528
        %v593 = vpack.c.b16 %v533, %v531
        %v594 = vpack.c.b16 %v534, %v532
        %v595 = vpack.c.b16 %v537, %v535
        %v596 = vpack.c.b16 %v538, %v536
        %v597 = vpack.c.b16 %v541, %v539
        %v598 = vpack.c.b16 %v542, %v540
        %v599 = vpack.c.b16 %v545, %v543
        %v600 = vpack.c.b16 %v546, %v544
        %v601 = vpack.c.b16 %v549, %v547
        %v602 = vpack.c.b16 %v550, %v548
        %v603 = vpack.c.b16 %v553, %v551
        %v604 = vpack.c.b16 %v554, %v552
        %v605 = vpack.c.b16 %v557, %v555
        %v606 = vpack.c.b16 %v558, %v556
        %v607 = vpack.c.b16 %v561, %v559
        %v608 = vpack.c.b16 %v562, %v560
        %v609 = vpack.c.b16 %v565, %v563
        %v610 = vpack.c.b16 %v566, %v564
        %v611 = vpack.c.b16 %v569, %v567
        %v612 = vpack.c.b16 %v570, %v568
        %v613 = vpack.c.b16 %v573, %v571
        %v614 = vpack.c.b16 %v574, %v572
        %v615 = vpack.c.b16 %v577, %v575
        %v616 = vpack.c.b16 %v578, %v576
        %v617 = vpack.c.b16 %v581, %v579
        %v618 = vpack.c.b16 %v582, %v580
        %v619 = vpack.c.b16 %v585, %v583
        %v620 = vpack.c.b16 %v586, %v584
        %v621 = vpack.c.b16 %v589, %v587
        %v622 = vpack.c.b16 %v590, %v588
        %655 = vmatprep.subr.bf16.mxu0 %v592
        %656 = vmatpush1.bf16.msra.mxu0 %v591
        %657 = vmatprep.subr.bf16.mxu0 %v594
        %658 = vmatpush1.bf16.msra.mxu0 %v593
        %659 = vmatprep.subr.bf16.mxu0 %v596
        %660 = vmatpush1.bf16.msra.mxu0 %v595
        %661 = vmatprep.subr.bf16.mxu0 %v598
        %662 = vmatpush1.bf16.msra.mxu0 %v597
        %663 = vmatprep.subr.bf16.mxu0 %v600
        %664 = vmatpush1.bf16.msra.mxu0 %v599
        %665 = vmatprep.subr.bf16.mxu0 %v602
        %666 = vmatpush1.bf16.msra.mxu0 %v601
        %667 = vmatprep.subr.bf16.mxu0 %v604
        %668 = vmatpush1.bf16.msra.mxu0 %v603
        %669 = vmatprep.subr.bf16.mxu0 %v606
        %670 = vmatpush1.bf16.msra.mxu0 %v605
        %671 = vmatprep.subr.bf16.mxu0 %v608
        %672 = vmatpush1.bf16.msra.mxu0 %v607
        %673 = vmatprep.subr.bf16.mxu0 %v610
        %674 = vmatpush1.bf16.msra.mxu0 %v609
        %675 = vmatprep.subr.bf16.mxu0 %v612
        %676 = vmatpush1.bf16.msra.mxu0 %v611
        %677 = vmatprep.subr.bf16.mxu0 %v614
        %678 = vmatpush1.bf16.msra.mxu0 %v613
        %679 = vmatprep.subr.bf16.mxu0 %v616
        %680 = vmatpush1.bf16.msra.mxu0 %v615
        %681 = vmatprep.subr.bf16.mxu0 %v618
        %682 = vmatpush1.bf16.msra.mxu0 %v617
        %683 = vmatprep.subr.bf16.mxu0 %v620
        %684 = vmatpush1.bf16.msra.mxu0 %v619
        %685 = vmatprep.subr.bf16.mxu0 %v622
        %686 = vmatpush1.bf16.msra.mxu0 %v621
        %687 = vmatprep.mubr.bf16.mxu0 %v438
        %688 = vmatmul.mubr.bf16.gmra.mrb[0].mxu0 %v437
        %v689 = vpop.f32.mrb[0].mxu0
        %v690 = vadd.f32 %v488, %v689
        %v691 = vpop.f32.mrb[0].mxu0
        %v692 = vadd.f32 %v492, %v691
        %v693 = vpop.f32.mrb[0].mxu0
        %v694 = vadd.f32 %v488, %v693
        %v695 = vpop.f32.mrb[0].mxu0
        %v696 = vadd.f32 %v492, %v695
        %697 = vmatprep.mubr.bf16.mxu0 %v448
        %698 = vmatmul.mubr.bf16.gmra.mrb[0].mxu0 %v447
        %v699 = vpop.f32.mrb[0].mxu0
        %v700 = vadd.f32 %v488, %v699
        %v701 = vpop.f32.mrb[0].mxu0
        %v702 = vadd.f32 %v492, %v701
        %v703 = vpop.f32.mrb[0].mxu0
        %v704 = vadd.f32 %v488, %v703
        %v705 = vpop.f32.mrb[0].mxu0
        %v706 = vadd.f32 %v492, %v705
        %707 = vdwg.mxu0
        %v708 = vmax.f32 %v690, 0.0
        %v709 = vmax.f32 %v692, 0.0
        %v710 = vmax.f32 %v694, 0.0
        %v711 = vmax.f32 %v696, 0.0
        %v712 = vmax.f32 %v700, 0.0
        %v713 = vmax.f32 %v702, 0.0
        %v714 = vmax.f32 %v704, 0.0
        %v715 = vmax.f32 %v706, 0.0
        %v716 = vpack.c.bf16 %v710, %v708
        %v717 = vpack.c.bf16 %v711, %v709
        %v718 = vpack.c.bf16 %v714, %v712
        %v719 = vpack.c.bf16 %v715, %v713
        %v720 = vld [vmem:[#allocation9] sm:$0xf]
        %v721 = vld [vmem:[#allocation9 + $0x4] sm:$0xf]
        %v722 = vld [vmem:[#allocation9 + $0x8] sm:$0xf]
        %v723 = vld [vmem:[#allocation9 + $0xc] sm:$0xf]
        %v724 = vld [vmem:[#allocation9 + $0x10] sm:$0xf]
        %v725 = vld [vmem:[#allocation9 + $0x14] sm:$0xf]
        %v726 = vld [vmem:[#allocation9 + $0x18] sm:$0xf]
        %v727 = vld [vmem:[#allocation9 + $0x1c] sm:$0xf]
        %v728 = vld [vmem:[#allocation9 + $0x20] sm:$0xf]
        %v729 = vld [vmem:[#allocation9 + $0x24] sm:$0xf]
        %v730 = vld [vmem:[#allocation9 + $0x28] sm:$0xf]
        %v731 = vld [vmem:[#allocation9 + $0x2c] sm:$0xf]
        %v732 = vld [vmem:[#allocation9 + $0x30] sm:$0xf]
        %v733 = vld [vmem:[#allocation9 + $0x34] sm:$0xf]
        %v734 = vld [vmem:[#allocation9 + $0x38] sm:$0xf]
        %v735 = vld [vmem:[#allocation9 + $0x3c] sm:$0xf]
        %v736 = vld [vmem:[#allocation9 + $0x40] sm:$0xf]
        %v737 = vld [vmem:[#allocation9 + $0x44] sm:$0xf]
        %v738 = vld [vmem:[#allocation9 + $0x48] sm:$0xf]
        %v739 = vld [vmem:[#allocation9 + $0x4c] sm:$0xf]
        %v740 = vld [vmem:[#allocation9 + $0x50] sm:$0xf]
        %v741 = vld [vmem:[#allocation9 + $0x54] sm:$0xf]
        %v742 = vld [vmem:[#allocation9 + $0x58] sm:$0xf]
        %v743 = vld [vmem:[#allocation9 + $0x5c] sm:$0xf]
        %v744 = vld [vmem:[#allocation9 + $0x60] sm:$0xf]
        %v745 = vld [vmem:[#allocation9 + $0x64] sm:$0xf]
        %v746 = vld [vmem:[#allocation9 + $0x68] sm:$0xf]
        %v747 = vld [vmem:[#allocation9 + $0x6c] sm:$0xf]
        %v748 = vld [vmem:[#allocation9 + $0x70] sm:$0xf]
        %v749 = vld [vmem:[#allocation9 + $0x74] sm:$0xf]
        %v750 = vld [vmem:[#allocation9 + $0x78] sm:$0xf]
        %v751 = vld [vmem:[#allocation9 + $0x7c] sm:$0xf]
        %v784 = vunpack.c.l.b16 %v720
        %v785 = vunpack.c.l.b16 %v721
        %v786 = vunpack.c.l.b16 %v722
        %v787 = vunpack.c.l.b16 %v723
        %v788 = vunpack.c.l.b16 %v724
        %v789 = vunpack.c.l.b16 %v725
        %v790 = vunpack.c.l.b16 %v726
        %v791 = vunpack.c.l.b16 %v727
        %v792 = vunpack.c.l.b16 %v728
        %v793 = vunpack.c.l.b16 %v729
        %v794 = vunpack.c.l.b16 %v730
        %v795 = vunpack.c.l.b16 %v731
        %v796 = vunpack.c.l.b16 %v732
        %v797 = vunpack.c.l.b16 %v733
        %v798 = vunpack.c.l.b16 %v734
        %v799 = vunpack.c.l.b16 %v735
        %v800 = vunpack.c.l.b16 %v736
        %v801 = vunpack.c.l.b16 %v737
        %v802 = vunpack.c.l.b16 %v738
        %v803 = vunpack.c.l.b16 %v739
        %v804 = vunpack.c.l.b16 %v740
        %v805 = vunpack.c.l.b16 %v741
        %v806 = vunpack.c.l.b16 %v742
        %v807 = vunpack.c.l.b16 %v743
        %v808 = vunpack.c.l.b16 %v744
        %v809 = vunpack.c.l.b16 %v745
        %v810 = vunpack.c.l.b16 %v746
        %v811 = vunpack.c.l.b16 %v747
        %v812 = vunpack.c.l.b16 %v748
        %v813 = vunpack.c.l.b16 %v749
        %v814 = vunpack.c.l.b16 %v750
        %v815 = vunpack.c.l.b16 %v751
        %v816 = vpack.c.b16 %v785, %v784
        %v817 = vpack.c.b16 %v787, %v786
        %v818 = vpack.c.b16 %v789, %v788
        %v819 = vpack.c.b16 %v791, %v790
        %v820 = vpack.c.b16 %v793, %v792
        %v821 = vpack.c.b16 %v795, %v794
        %v822 = vpack.c.b16 %v797, %v796
        %v823 = vpack.c.b16 %v799, %v798
        %v824 = vpack.c.b16 %v801, %v800
        %v825 = vpack.c.b16 %v803, %v802
        %v826 = vpack.c.b16 %v805, %v804
        %v827 = vpack.c.b16 %v807, %v806
        %v828 = vpack.c.b16 %v809, %v808
        %v829 = vpack.c.b16 %v811, %v810
        %v830 = vpack.c.b16 %v813, %v812
        %v831 = vpack.c.b16 %v815, %v814
        %848 = vmatprep.subr.bf16.mxu0 0
        %849 = vmatpush1.bf16.msra.mxu0 %v816
        %850 = vmatprep.subr.bf16.mxu0 0
        %851 = vmatpush1.bf16.msra.mxu0 %v817
        %852 = vmatprep.subr.bf16.mxu0 0
        %853 = vmatpush1.bf16.msra.mxu0 %v818
        %854 = vmatprep.subr.bf16.mxu0 0
        %855 = vmatpush1.bf16.msra.mxu0 %v819
        %856 = vmatprep.subr.bf16.mxu0 0
        %857 = vmatpush1.bf16.msra.mxu0 %v820
        %858 = vmatprep.subr.bf16.mxu0 0
        %859 = vmatpush1.bf16.msra.mxu0 %v821
        %860 = vmatprep.subr.bf16.mxu0 0
        %861 = vmatpush1.bf16.msra.mxu0 %v822
        %862 = vmatprep.subr.bf16.mxu0 0
        %863 = vmatpush1.bf16.msra.mxu0 %v823
        %864 = vmatprep.subr.bf16.mxu0 0
        %865 = vmatpush1.bf16.msra.mxu0 %v824
        %866 = vmatprep.subr.bf16.mxu0 0
        %867 = vmatpush1.bf16.msra.mxu0 %v825
        %868 = vmatprep.subr.bf16.mxu0 0
        %869 = vmatpush1.bf16.msra.mxu0 %v826
        %870 = vmatprep.subr.bf16.mxu0 0
        %871 = vmatpush1.bf16.msra.mxu0 %v827
        %872 = vmatprep.subr.bf16.mxu0 0
        %873 = vmatpush1.bf16.msra.mxu0 %v828
        %874 = vmatprep.subr.bf16.mxu0 0
        %875 = vmatpush1.bf16.msra.mxu0 %v829
        %876 = vmatprep.subr.bf16.mxu0 0
        %877 = vmatpush1.bf16.msra.mxu0 %v830
        %878 = vmatprep.subr.bf16.mxu0 0
        %879 = vmatpush1.bf16.msra.mxu0 %v831
        %880 = vmatprep.mubr.bf16.mxu0 %v717
        %881 = vmatmul.mubr.bf16.gmra.mrb[0].mxu0 %v716
        %v882 = vpop.f32.mrb[0].mxu0
        %v883 = vadd.f32 0.0, %v882
        %v884 = vpop.f32.mrb[0].mxu0
        %v885 = vpop.f32.mrb[0].mxu0
        %v886 = vadd.f32 0.0, %v885
        %v887 = vpop.f32.mrb[0].mxu0
        %888 = vmatprep.mubr.bf16.mxu0 %v719
        %889 = vmatmul.mubr.bf16.gmra.mrb[0].mxu0 %v718
        %v890 = vpop.f32.mrb[0].mxu0
        %v891 = vadd.f32 0.0, %v890
        %v892 = vpop.f32.mrb[0].mxu0
        %v893 = vpop.f32.mrb[0].mxu0
        %v894 = vadd.f32 0.0, %v893
        %v895 = vpop.f32.mrb[0].mxu0
        %896 = vdwg.mxu0
        %s897 = sld [smem:[#allocation11]]
        %s898 = sld [smem:[#allocation11 + $0x1]]
        %s899 = sld [smem:[#allocation11 + $0x2]]
        %v900 = vstv %s897
        %v901 = vadd.f32 %v883, %v900
        %v902 = vadd.f32 %v886, %v900
        %v903 = vadd.f32 %v891, %v900
        %v904 = vadd.f32 %v894, %v900
        %v905 = vmax.f32 %v901, 0.0
        %v906 = vmax.f32 %v902, 0.0
        %v907 = vmax.f32 %v903, 0.0
        %v908 = vmax.f32 %v904, 0.0
        %v909 = vstv %s898
        %v910 = vmul.f32 %v905, %v909
        %v911 = vmul.f32 %v906, %v909
        %v912 = vmul.f32 %v907, %v909
        %v913 = vmul.f32 %v908, %v909
        %v914 = vstv %s899
        %v915 = vadd.f32 %v910, %v914
        %v916 = vadd.f32 %v911, %v914
        %v917 = vadd.f32 %v912, %v914
        %v918 = vadd.f32 %v913, %v914
        %v919 = vxor.u32 %v915, 2147483648
        %v920 = vxor.u32 %v916, 2147483648
        %v921 = vxor.u32 %v917, 2147483648
        %v922 = vxor.u32 %v918, 2147483648
        %v923 = vmul.f32 %v919, 1.442695
        %v924 = vpow.pop %v923
        %v925 = vmul.f32 %v920, 1.442695
        %v926 = vpow.pop %v925
        %v927 = vmul.f32 %v921, 1.442695
        %v928 = vpow.pop %v927
        %v929 = vmul.f32 %v922, 1.442695
        %v930 = vpow.pop %v929
        %v931 = vadd.f32 %v924, 1.0
        %v932 = vadd.f32 %v926, 1.0
        %v933 = vadd.f32 %v928, 1.0
        %v934 = vadd.f32 %v930, 1.0
        %v935 = vrcp.pop %v931
        %v936 = vmul.f32 1.0, %v935
        %v937 = vrcp.pop %v932
        %v938 = vmul.f32 1.0, %v937
        %v939 = vrcp.pop %v933
        %v940 = vmul.f32 1.0, %v939
        %v941 = vrcp.pop %v934
        %v942 = vmul.f32 1.0, %v941
        %v943 = vadd.f32 %v936, %v940
        %v944 = vadd.f32 %v938, %v942
        %v945 = vrcp.pop %v943
        %v946 = vrcp.pop %v944
        %v947 = vmul.f32 %v936, %v945
        %v948 = vmul.f32 %v938, %v946
        %v949 = vmul.f32 %v940, %v945
        %v950 = vmul.f32 %v942, %v946
        %v951 = vpack.c.bf16 %v948, %v947
        %953 = vset.pattern.permute.xlu0 0
        %954 = vperm.xlu0 %953, %v951
        %v955 = vpop.permute.xlu0 %954
        %v957 = vmul.bf16 %v955, %v716
        %v958 = vmul.bf16 %v955, %v717
        %v959 = vpack.c.bf16 %v950, %v949
        %961 = vset.pattern.permute.xlu0 0
        %962 = vperm.xlu0 %961, %v959
        %v963 = vpop.permute.xlu0 %962
        %v965 = vmul.bf16 %v963, %v718
        %v966 = vmul.bf16 %v963, %v719
        %v967 = vadd.bf16 %v957, %v965
        %v968 = vadd.bf16 %v958, %v966
        %v969 = vld [vmem:[#allocation12] sm:$0xff]
        %v970 = vld [vmem:[#allocation12 + $0x8] sm:$0xff]
        %v971 = vld [vmem:[#allocation12 + $0x10] sm:$0xff]
        %v972 = vld [vmem:[#allocation12 + $0x18] sm:$0xff]
        %v973 = vld [vmem:[#allocation12 + $0x20] sm:$0xff]
        %v974 = vld [vmem:[#allocation12 + $0x28] sm:$0xff]
        %v975 = vld [vmem:[#allocation12 + $0x30] sm:$0xff]
        %v976 = vld [vmem:[#allocation12 + $0x38] sm:$0xff]
        %v977 = vld [vmem:[#allocation12 + $0x40] sm:$0xff]
        %v978 = vld [vmem:[#allocation12 + $0x48] sm:$0xff]
        %v979 = vld [vmem:[#allocation12 + $0x50] sm:$0xff]
        %v980 = vld [vmem:[#allocation12 + $0x58] sm:$0xff]
        %v981 = vld [vmem:[#allocation12 + $0x60] sm:$0xff]
        %v982 = vld [vmem:[#allocation12 + $0x68] sm:$0xff]
        %v983 = vld [vmem:[#allocation12 + $0x70] sm:$0xff]
        %v984 = vld [vmem:[#allocation12 + $0x78] sm:$0xff]
        %v985 = vld [vmem:[#allocation12 + $0x80] sm:$0xff]
        %v986 = vld [vmem:[#allocation12 + $0x88] sm:$0xff]
        %v987 = vld [vmem:[#allocation12 + $0x90] sm:$0xff]
        %v988 = vld [vmem:[#allocation12 + $0x98] sm:$0xff]
        %v989 = vld [vmem:[#allocation12 + $0xa0] sm:$0xff]
        %v990 = vld [vmem:[#allocation12 + $0xa8] sm:$0xff]
        %v991 = vld [vmem:[#allocation12 + $0xb0] sm:$0xff]
        %v992 = vld [vmem:[#allocation12 + $0xb8] sm:$0xff]
        %v993 = vld [vmem:[#allocation12 + $0xc0] sm:$0xff]
        %v994 = vld [vmem:[#allocation12 + $0xc8] sm:$0xff]
        %v995 = vld [vmem:[#allocation12 + $0xd0] sm:$0xff]
        %v996 = vld [vmem:[#allocation12 + $0xd8] sm:$0xff]
        %v997 = vld [vmem:[#allocation12 + $0xe0] sm:$0xff]
        %v998 = vld [vmem:[#allocation12 + $0xe8] sm:$0xff]
        %v999 = vld [vmem:[#allocation12 + $0xf0] sm:$0xff]
        %v1000 = vld [vmem:[#allocation12 + $0xf8] sm:$0xff]
        %v1001 = vld [vmem:[%s7] sm:$0x3]
        %v1003 = vlaneseq
        %v1004 = vshrl.u32 %v1003, 7
        %v1005 = vsub.s32 0, %v1004
        %v1006 = vrot.slane %v1001, %v1005
        %v1007 = vlaneseq
        %v1008 = vshrl.u32 %v1007, 7
        %v1009 = vsub.s32 1, %v1008
        %v1010 = vrot.slane %v1001, %v1009
        %v1045 = vunpack.c.l.b16 %v969
        %v1046 = vunpack.c.h.b16 %v969
        %v1047 = vunpack.c.l.b16 %v970
        %v1048 = vunpack.c.h.b16 %v970
        %v1049 = vunpack.c.l.b16 %v971
        %v1050 = vunpack.c.h.b16 %v971
        %v1051 = vunpack.c.l.b16 %v972
        %v1052 = vunpack.c.h.b16 %v972
        %v1053 = vunpack.c.l.b16 %v973
        %v1054 = vunpack.c.h.b16 %v973
        %v1055 = vunpack.c.l.b16 %v974
        %v1056 = vunpack.c.h.b16 %v974
        %v1057 = vunpack.c.l.b16 %v975
        %v1058 = vunpack.c.h.b16 %v975
        %v1059 = vunpack.c.l.b16 %v976
        %v1060 = vunpack.c.h.b16 %v976
        %v1061 = vunpack.c.l.b16 %v977
        %v1062 = vunpack.c.h.b16 %v977
        %v1063 = vunpack.c.l.b16 %v978
        %v1064 = vunpack.c.h.b16 %v978
        %v1065 = vunpack.c.l.b16 %v979
        %v1066 = vunpack.c.h.b16 %v979
        %v1067 = vunpack.c.l.b16 %v980
        %v1068 = vunpack.c.h.b16 %v980
        %v1069 = vunpack.c.l.b16 %v981
        %v1070 = vunpack.c.h.b16 %v981
        %v1071 = vunpack.c.l.b16 %v982
        %v1072 = vunpack.c.h.b16 %v982
        %v1073 = vunpack.c.l.b16 %v983
        %v1074 = vunpack.c.h.b16 %v983
        %v1075 = vunpack.c.l.b16 %v984
        %v1076 = vunpack.c.h.b16 %v984
        %v1077 = vunpack.c.l.b16 %v985
        %v1078 = vunpack.c.h.b16 %v985
        %v1079 = vunpack.c.l.b16 %v986
        %v1080 = vunpack.c.h.b16 %v986
        %v1081 = vunpack.c.l.b16 %v987
        %v1082 = vunpack.c.h.b16 %v987
        %v1083 = vunpack.c.l.b16 %v988
        %v1084 = vunpack.c.h.b16 %v988
        %v1085 = vunpack.c.l.b16 %v989
        %v1086 = vunpack.c.h.b16 %v989
        %v1087 = vunpack.c.l.b16 %v990
        %v1088 = vunpack.c.h.b16 %v990
        %v1089 = vunpack.c.l.b16 %v991
        %v1090 = vunpack.c.h.b16 %v991
        %v1091 = vunpack.c.l.b16 %v992
        %v1092 = vunpack.c.h.b16 %v992
        %v1093 = vunpack.c.l.b16 %v993
        %v1094 = vunpack.c.h.b16 %v993
        %v1095 = vunpack.c.l.b16 %v994
        %v1096 = vunpack.c.h.b16 %v994
        %v1097 = vunpack.c.l.b16 %v995
        %v1098 = vunpack.c.h.b16 %v995
        %v1099 = vunpack.c.l.b16 %v996
        %v1100 = vunpack.c.h.b16 %v996
        %v1101 = vunpack.c.l.b16 %v997
        %v1102 = vunpack.c.h.b16 %v997
        %v1103 = vunpack.c.l.b16 %v998
        %v1104 = vunpack.c.h.b16 %v998
        %v1105 = vunpack.c.l.b16 %v999
        %v1106 = vunpack.c.h.b16 %v999
        %v1107 = vunpack.c.l.b16 %v1000
        %v1108 = vunpack.c.h.b16 %v1000
        %v1109 = vpack.c.b16 %v1047, %v1045
        %v1110 = vpack.c.b16 %v1048, %v1046
        %v1111 = vpack.c.b16 %v1051, %v1049
        %v1112 = vpack.c.b16 %v1052, %v1050
        %v1113 = vpack.c.b16 %v1055, %v1053
        %v1114 = vpack.c.b16 %v1056, %v1054
        %v1115 = vpack.c.b16 %v1059, %v1057
        %v1116 = vpack.c.b16 %v1060, %v1058
        %v1117 = vpack.c.b16 %v1063, %v1061
        %v1118 = vpack.c.b16 %v1064, %v1062
        %v1119 = vpack.c.b16 %v1067, %v1065
        %v1120 = vpack.c.b16 %v1068, %v1066
        %v1121 = vpack.c.b16 %v1071, %v1069
        %v1122 = vpack.c.b16 %v1072, %v1070
        %v1123 = vpack.c.b16 %v1075, %v1073
        %v1124 = vpack.c.b16 %v1076, %v1074
        %v1125 = vpack.c.b16 %v1079, %v1077
        %v1126 = vpack.c.b16 %v1080, %v1078
        %v1127 = vpack.c.b16 %v1083, %v1081
        %v1128 = vpack.c.b16 %v1084, %v1082
        %v1129 = vpack.c.b16 %v1087, %v1085
        %v1130 = vpack.c.b16 %v1088, %v1086
        %v1131 = vpack.c.b16 %v1091, %v1089
        %v1132 = vpack.c.b16 %v1092, %v1090
        %v1133 = vpack.c.b16 %v1095, %v1093
        %v1134 = vpack.c.b16 %v1096, %v1094
        %v1135 = vpack.c.b16 %v1099, %v1097
        %v1136 = vpack.c.b16 %v1100, %v1098
        %v1137 = vpack.c.b16 %v1103, %v1101
        %v1138 = vpack.c.b16 %v1104, %v1102
        %v1139 = vpack.c.b16 %v1107, %v1105
        %v1140 = vpack.c.b16 %v1108, %v1106
        %1173 = vmatprep.subr.bf16.mxu0 %v1110
        %1174 = vmatpush1.bf16.msra.mxu0 %v1109
        %1175 = vmatprep.subr.bf16.mxu0 %v1112
        %1176 = vmatpush1.bf16.msra.mxu0 %v1111
        %1177 = vmatprep.subr.bf16.mxu0 %v1114
        %1178 = vmatpush1.bf16.msra.mxu0 %v1113
        %1179 = vmatprep.subr.bf16.mxu0 %v1116
        %1180 = vmatpush1.bf16.msra.mxu0 %v1115
        %1181 = vmatprep.subr.bf16.mxu0 %v1118
        %1182 = vmatpush1.bf16.msra.mxu0 %v1117
        %1183 = vmatprep.subr.bf16.mxu0 %v1120
        %1184 = vmatpush1.bf16.msra.mxu0 %v1119
        %1185 = vmatprep.subr.bf16.mxu0 %v1122
        %1186 = vmatpush1.bf16.msra.mxu0 %v1121
        %1187 = vmatprep.subr.bf16.mxu0 %v1124
        %1188 = vmatpush1.bf16.msra.mxu0 %v1123
        %1189 = vmatprep.subr.bf16.mxu0 %v1126
        %1190 = vmatpush1.bf16.msra.mxu0 %v1125
        %1191 = vmatprep.subr.bf16.mxu0 %v1128
        %1192 = vmatpush1.bf16.msra.mxu0 %v1127
        %1193 = vmatprep.subr.bf16.mxu0 %v1130
        %1194 = vmatpush1.bf16.msra.mxu0 %v1129
        %1195 = vmatprep.subr.bf16.mxu0 %v1132
        %1196 = vmatpush1.bf16.msra.mxu0 %v1131
        %1197 = vmatprep.subr.bf16.mxu0 %v1134
        %1198 = vmatpush1.bf16.msra.mxu0 %v1133
        %1199 = vmatprep.subr.bf16.mxu0 %v1136
        %1200 = vmatpush1.bf16.msra.mxu0 %v1135
        %1201 = vmatprep.subr.bf16.mxu0 %v1138
        %1202 = vmatpush1.bf16.msra.mxu0 %v1137
        %1203 = vmatprep.subr.bf16.mxu0 %v1140
        %1204 = vmatpush1.bf16.msra.mxu0 %v1139
        %1205 = vmatprep.mubr.bf16.mxu0 %v968
        %1206 = vmatmul.mubr.bf16.gmra.mrb[0].mxu0 %v967
        %v1207 = vpop.f32.mrb[0].mxu0
        %v1208 = vadd.f32 %v1006, %v1207
        %v1209 = vpop.f32.mrb[0].mxu0
        %v1210 = vadd.f32 %v1010, %v1209
        %v1211 = vpop.f32.mrb[0].mxu0
        %v1212 = vadd.f32 %v1006, %v1211
        %v1213 = vpop.f32.mrb[0].mxu0
        %v1214 = vadd.f32 %v1010, %v1213
        %1215 = vdwg.mxu0
        %1216 = vst [vmem:[%s422] sm:$0xff] %v1208
        %1217 = vst [vmem:[%s422 + $0x8] sm:$0xff] %v1210
        %1218 = vst [vmem:[%s422 + $0x10] sm:$0xff] %v1212
        %1219 = vst [vmem:[%s422 + $0x18] sm:$0xff] %v1214
        %s1220 = sand.u32 %s216, 1
        %s1221 = scalar_lea.sflag [#allocation4], %s1220
        %s1222 = sand.u32 %s216, 1
        %s1223 = smul.addr %s1222, 32
        %s1224 = scalar_lea.vmem [#allocation13], %s1223
        // Predicated region
        $region77: #{tpu_custom_call.1} parent=51 // pred_check
          %p1225 = pneg %p226
        $region78: #{tpu_custom_call.1} parent=51 // pred_check_branch
          %1227 = sbr.rel (%p1225) target = $region80
        $region79: #{tpu_custom_call.1} parent=51 // pred_region
          %s1228 = smul.u32 2, %s30
          %s1230 = ssub.s32 512, 512
          %1231 = vsyncadd %s1221, %s1230
          %s1232 = smul.addr %s1228, 2
          %s1233 = smul.addr %s1232, 128
          %s1234 = scalar_lea.hbm %s8, %s1233
          %s1235 = sshll.u32 %s1224, 4
          %s1236 = int_to_ptr.vmem [resolvable:$true] %s1235
          %1241 = dma.vmem_to_hbm [thread:$0]  %s1236, 512, %s1234, %s1221, 256, 256, 16
        $region80: #{tpu_custom_call.1} parent=51 // pred_fallthru
          _
      $region52: #{tpu_custom_call.1} parent=5 // pred_fallthru
        _
      %p1242 = scmp.le.s32.totalorder 2, %s25
      // Predicated region
      $region81: #{tpu_custom_call.1} parent=5 // pred_check
        %p1243 = pneg %p1242
      $region82: #{tpu_custom_call.1} parent=5 // pred_check_branch
        %1245 = sbr.rel (%p1243) target = $region84
      $region83: #{tpu_custom_call.1} parent=5 // pred_region
        %s1246 = ssub.s32 %s25, 2
        // Predicated region
        $region85: #{tpu_custom_call.1} parent=83 // pred_check
          %p1247 = pneg %p232
        $region86: #{tpu_custom_call.1} parent=83 // pred_check_branch
          %1249 = sbr.rel (%p1247) target = $region88
        $region87: #{tpu_custom_call.1} parent=83 // pred_region
          %s1250 = sand.u32 %s217, 1
          %s1251 = scalar_lea.sflag [#allocation4], %s1250
          %s1252 = sand.u32 %s217, 1
          %s1253 = smul.addr %s1252, 32
          %s1254 = scalar_lea.vmem [#allocation13], %s1253
          %1255 = dma.done %s1251, 512
        $region88: #{tpu_custom_call.1} parent=83 // pred_fallthru
          _
      $region84: #{tpu_custom_call.1} parent=5 // pred_fallthru
        _
    $region6: #{tpu_custom_call.1} parent=1 // loop_footer
      %s29 = sadd.s32 1, %s25
    $region7: #{tpu_custom_call.1} parent=1 // loop_footer_branch
      %24 = sbr.rel target = $region3
    $region8: #{tpu_custom_call.1} parent=1 // loop_exit
      _
    %1256 = vsyncpa [#allocation3], 1
    %s1257 = scalar_lea.sflag [#allocation3], 1
    %1258 = vsyncpa %s1257, 1
    %1259 = vsyncpa [#allocation7], 1
    %s1260 = scalar_lea.sflag [#allocation7], 1
    %1261 = vsyncpa %s1260, 1
    %1262 = vsyncpa [#allocation10], 1
    %1263 = vsyncpa [#allocation4], 1
    %s1264 = scalar_lea.sflag [#allocation4], 1
    %1265 = vsyncpa %s1264, 1
    %1266 = vsyncpa [#allocation5], 1
    %s1267 = scalar_lea.sflag [#allocation5], 1
    %1268 = vsyncpa %s1267, 1

</llo_original>
